<compile_context>
chip_gen: v7x
topology: tpu7x:2x2x1
jax: 0.10.0
libtpu: 0.0.40
codegen_flags: <defaults>
</compile_context>

<pallas_src>
import jax
import jax.numpy as jnp
from jax.experimental import pallas as pl
from jax.experimental.pallas import tpu as pltpu


# ----------------------------------------------------------------------------
# Helpers
# ----------------------------------------------------------------------------

def _round_up(x, m):
    return ((x + m - 1) // m) * m


def _pick_tm(M, cap=512):
    """Largest row-tile <= cap that divides M and is a multiple of 8 (or M)."""
    if M <= cap:
        return M
    t = cap
    while t >= 8:
        if M % t == 0 and t % 8 == 0:
            return t
        t -= 8
    return M


# ----------------------------------------------------------------------------
# Fused matmul kernel (optional BN prologue / residual epilogue / stats)
# ----------------------------------------------------------------------------

def _make_mm_kernel(has_pro, has_res, has_stats):
    def kernel(*refs):
        it = iter(refs)
        a_ref = next(it)
        b_ref = next(it)
        sc_ref = next(it) if has_pro else None
        sh_ref = next(it) if has_pro else None
        r_ref = next(it) if has_res else None
        y_ref = next(it)
        s_ref = next(it) if has_stats else None
        q_ref = next(it) if has_stats else None

        a = a_ref[...]
        if has_pro:
            # Pre-activation BN + ReLU applied to the (im2col'd) input tile.
            a = jnp.maximum(a.astype(jnp.float32) * sc_ref[...] + sh_ref[...], 0.0)
        acc = jnp.dot(a.astype(jnp.bfloat16), b_ref[...],
                      preferred_element_type=jnp.float32)
        if has_res:
            acc = acc + r_ref[...].astype(jnp.float32)
        y_ref[...] = acc.astype(y_ref.dtype)
        if has_stats:
            @pl.when(pl.program_id(0) == 0)
            def _():
                s_ref[...] = jnp.zeros_like(s_ref)
                q_ref[...] = jnp.zeros_like(q_ref)
            s_ref[...] += jnp.sum(acc, axis=0, keepdims=True)
            q_ref[...] += jnp.sum(acc * acc, axis=0, keepdims=True)
    return kernel


def fused_matmul(a, b, *, scale=None, shift=None, residual=None,
                 want_stats=False, out_dtype=jnp.bfloat16):
    """a: (M, K) bf16 @ b: (K, N) bf16 with optional fused BN-prologue on A,
    residual-add epilogue and per-channel sum/sumsq stats of the f32 result."""
    M, K = a.shape
    K2, N = b.shape
    assert K == K2
    tm = _pick_tm(M)
    assert M % tm == 0
    grid = (M // tm,)

    in_specs = [pl.BlockSpec((tm, K), lambda i: (i, 0)),
                pl.BlockSpec((K, N), lambda i: (0, 0))]
    args = [a, b]
    has_pro = scale is not None
    if has_pro:
        in_specs += [pl.BlockSpec((1, K), lambda i: (0, 0)),
                     pl.BlockSpec((1, K), lambda i: (0, 0))]
        args += [scale.reshape(1, K).astype(jnp.float32),
                 shift.reshape(1, K).astype(jnp.float32)]
    has_res = residual is not None
    if has_res:
        in_specs.append(pl.BlockSpec((tm, N), lambda i: (i, 0)))
        args.append(residual)

    out_shapes = [jax.ShapeDtypeStruct((M, N), out_dtype)]
    out_specs = [pl.BlockSpec((tm, N), lambda i: (i, 0))]
    if want_stats:
        out_shapes += [jax.ShapeDtypeStruct((1, N), jnp.float32),
                       jax.ShapeDtypeStruct((1, N), jnp.float32)]
        out_specs += [pl.BlockSpec((1, N), lambda i: (0, 0)),
                      pl.BlockSpec((1, N), lambda i: (0, 0))]

    kernel = _make_mm_kernel(has_pro, has_res, want_stats)
    # Stats outputs are resident across the grid axis -> that axis must be
    # sequential ("arbitrary"); otherwise it is fully parallel.
    sem = ("arbitrary",) if want_stats else ("parallel",)

    if want_stats:
        return pl.pallas_call(
            kernel,
            out_shape=tuple(out_shapes),
            grid=grid,
            in_specs=in_specs,
            out_specs=tuple(out_specs),
            compiler_params=pltpu.CompilerParams(dimension_semantics=sem),
        )(*args)
    return pl.pallas_call(
        kernel,
        out_shape=out_shapes[0],
        grid=grid,
        in_specs=in_specs,
        out_specs=out_specs[0],
        compiler_params=pltpu.CompilerParams(dimension_semantics=sem),
    )(*args)


# ----------------------------------------------------------------------------
# Fused elementwise BN-scale/shift + ReLU + stats-of-output (used once: prep)
# ----------------------------------------------------------------------------

def _bn_relu_stats_kernel(x_ref, sc_ref, sh_ref, o_ref, s_ref, q_ref):
    @pl.when(pl.program_id(0) == 0)
    def _():
        s_ref[...] = jnp.zeros_like(s_ref)
        q_ref[...] = jnp.zeros_like(q_ref)
    y = jnp.maximum(x_ref[...].astype(jnp.float32) * sc_ref[...] + sh_ref[...], 0.0)
    o_ref[...] = y.astype(o_ref.dtype)
    s_ref[...] += jnp.sum(y, axis=0, keepdims=True)
    q_ref[...] += jnp.sum(y * y, axis=0, keepdims=True)


def pallas_bn_relu_stats(x2d, scale, shift):
    """y = relu(x*scale+shift) (bf16) plus per-channel sum / sumsq of y."""
    M, C = x2d.shape
    # Lane-fold narrow channel counts so stores are 128-lane dense.
    fold = 1
    if C < 128 and 128 % C == 0 and M % (128 // C) == 0:
        fold = 128 // C
    Mf, Cf = M // fold, C * fold
    xf = x2d.reshape(Mf, Cf)
    scf = jnp.tile(scale, fold).reshape(1, Cf).astype(jnp.float32)
    shf = jnp.tile(shift, fold).reshape(1, Cf).astype(jnp.float32)
    tm = _pick_tm(Mf)

    y, s, q = pl.pallas_call(
        _bn_relu_stats_kernel,
        out_shape=(jax.ShapeDtypeStruct((Mf, Cf), jnp.bfloat16),
                   jax.ShapeDtypeStruct((1, Cf), jnp.float32),
                   jax.ShapeDtypeStruct((1, Cf), jnp.float32)),
        grid=(Mf // tm,),
        in_specs=[pl.BlockSpec((tm, Cf), lambda i: (i, 0)),
                  pl.BlockSpec((1, Cf), lambda i: (0, 0)),
                  pl.BlockSpec((1, Cf), lambda i: (0, 0))],
        out_specs=(pl.BlockSpec((tm, Cf), lambda i: (i, 0)),
                   pl.BlockSpec((1, Cf), lambda i: (0, 0)),
                   pl.BlockSpec((1, Cf), lambda i: (0, 0))),
        compiler_params=pltpu.CompilerParams(dimension_semantics=("arbitrary",)),
    )(xf, scf, shf)

    y = y.reshape(M, C)
    s = s.reshape(fold, C).sum(axis=0, keepdims=True)
    q = q.reshape(fold, C).sum(axis=0, keepdims=True)
    return y, s, q


# ----------------------------------------------------------------------------
# Global avg + max pooling
# ----------------------------------------------------------------------------

def _pool_kernel(x_ref, avg_ref, max_ref):
    x = x_ref[0].astype(jnp.float32)                      # (HW, C)
    avg_ref[...] = jnp.mean(x, axis=0)[None, None, :]
    max_ref[...] = jnp.max(x, axis=0)[None, None, :]


def pallas_global_pool(x):
    """x: (N, H, W, C) -> (avg (N, C), max (N, C)), f32."""
    N, H, W, C = x.shape
    HW = H * W
    x3 = x.reshape(N, HW, C)
    avg, mx = pl.pallas_call(
        _pool_kernel,
        out_shape=(jax.ShapeDtypeStruct((N, 1, C), jnp.float32),
                   jax.ShapeDtypeStruct((N, 1, C), jnp.float32)),
        grid=(N,),
        in_specs=[pl.BlockSpec((1, HW, C), lambda n: (n, 0, 0))],
        out_specs=(pl.BlockSpec((1, 1, C), lambda n: (n, 0, 0)),
                   pl.BlockSpec((1, 1, C), lambda n: (n, 0, 0))),
        compiler_params=pltpu.CompilerParams(dimension_semantics=("parallel",)),
    )(x3)
    return avg[:, 0, :], mx[:, 0, :]


# ----------------------------------------------------------------------------
# Glue: im2col and BN coefficient math (tiny per-channel vectors, plain JAX)
# ----------------------------------------------------------------------------

def im2col3x3(x, stride):
    """x: (N,H,W,Cin) bf16, pad=1 -> (N*Ho*Wo, 9*Cin), columns tap-major."""
    N, H, W, Cin = x.shape
    xp = jnp.pad(x, ((0, 0), (1, 1), (1, 1), (0, 0)))
    Ho = (H - 1) // stride + 1
    Wo = (W - 1) // stride + 1
    cols = []
    for kh in range(3):
        for kw in range(3):
            cols.append(xp[:, kh:kh + (Ho - 1) * stride + 1:stride,
                           kw:kw + (Wo - 1) * stride + 1:stride, :])
    return jnp.stack(cols, axis=3).reshape(N * Ho * Wo, 9 * Cin)


def bn_coeffs(s, q, count, gamma, beta, eps=1e-5):
    """Per-channel affine (scale, shift) from fused sum/sumsq (batch stats)."""
    mean = s[0] / count
    var = jnp.maximum(q[0] / count - mean * mean, 0.0)
    scale = gamma / jnp.sqrt(var + eps)
    shift = beta - mean * scale
    return scale, shift


# ----------------------------------------------------------------------------
# Pre-activation residual block (2-3 fused pallas_calls total)
# ----------------------------------------------------------------------------

def preact_block(x, stats, blk):
    N, H, W, Cin = x.shape
    stride = blk['stride']
    Cout = blk['bn2_g'].shape[0]
    s, q, cnt = stats
    scale1, shift1 = bn_coeffs(s, q, cnt, blk['bn1_g'], blk['bn1_b'])

    Ho = (H - 1) // stride + 1
    Wo = (W - 1) // stride + 1
    M1 = N * Ho * Wo

    # conv1: BN1+ReLU prologue, stats of its output (feeds BN2).
    a1 = im2col3x3(x, stride)
    y1, s1, q1 = fused_matmul(a1, blk['conv1_w'],
                              scale=jnp.tile(scale1, 9),
                              shift=jnp.tile(shift1, 9),
                              want_stats=True)

    # Shortcut path.
    if 'sc_w' in blk:
        xs = x[:, ::stride, ::stride, :].reshape(M1, Cin)
        shortcut = fused_matmul(xs, blk['sc_w'], scale=scale1, shift=shift1)
    else:
        shortcut = x.reshape(M1, Cin)

    # conv2: BN2+ReLU prologue, residual-add epilogue, stats for next BN1.
    scale2, shift2 = bn_coeffs(s1, q1, M1, blk['bn2_g'], blk['bn2_b'])
    a2 = im2col3x3(y1.reshape(N, Ho, Wo, Cout), 1)
    y2, s2, q2 = fused_matmul(a2, blk['conv2_w'],
                              scale=jnp.tile(scale2, 9),
                              shift=jnp.tile(shift2, 9),
                              residual=shortcut,
                              want_stats=True)
    return y2.reshape(N, Ho, Wo, Cout), (s2, q2, M1)


# ----------------------------------------------------------------------------
# Parameters (deterministic synthetic init; weights pre-relayouted to matmul
# form and cast to bf16 once, per PyTorch module shapes)
# ----------------------------------------------------------------------------

def _conv_w(key, cout, cin, k):
    fan_in = cin * k * k
    w = jax.random.normal(key, (cout, cin, k, k), jnp.float32) * (2.0 / fan_in) ** 0.5
    # (Cout, Cin, kh, kw) -> (kh, kw, Cin, Cout) -> (k*k*Cin, Cout); row order
    # matches the tap-major / channel-minor im2col column order.
    return jnp.transpose(w, (2, 3, 1, 0)).reshape(k * k * cin, cout).astype(jnp.bfloat16)


def make_resnet18_params(key):
    keys = iter(jax.random.split(key, 64))
    p = {}
    p['prep_w'] = _conv_w(next(keys), 64, 3, 3)
    p['prep_bn_g'] = jnp.ones(64, jnp.float32)
    p['prep_bn_b'] = jnp.zeros(64, jnp.float32)

    stage_cfg = [(64, 64, 1), (64, 128, 2), (128, 256, 2), (256, 256, 2)]
    stages = []
    for cin, cout, stride in stage_cfg:
        blocks = []
        ic = cin
        for s in [stride, 1]:                         # num_blocks = 2 per stage
            blk = {
                'stride': s,
                'bn1_g': jnp.ones(ic, jnp.float32),
                'bn1_b': jnp.zeros(ic, jnp.float32),
                'conv1_w': _conv_w(next(keys), cout, ic, 3),
                'bn2_g': jnp.ones(cout, jnp.float32),
                'bn2_b': jnp.zeros(cout, jnp.float32),
                'conv2_w': _conv_w(next(keys), cout, cout, 3),
            }
            if s != 1 or ic != cout:
                blk['sc_w'] = _conv_w(next(keys), cout, ic, 1)
            blocks.append(blk)
            ic = cout
        stages.append(blocks)
    p['stages'] = stages

    p['fc_w'] = (jax.random.normal(next(keys), (10, 512), jnp.float32)
                 * (1.0 / 512) ** 0.5).T.astype(jnp.bfloat16)          # (512, 10)
    p['fc_b'] = jnp.zeros(10, jnp.float32)
    return p


# ----------------------------------------------------------------------------
# Full forward pass
# ----------------------------------------------------------------------------

def resnet18_forward(x_nchw, p):
    # PyTorch input convention is NCHW; convert to NHWC bf16 for the kernels.
    x = jnp.transpose(x_nchw.astype(jnp.float32), (0, 2, 3, 1)).astype(jnp.bfloat16)
    N, H, W, _ = x.shape

    # prep: Conv3x3(3->64) with fused stats, then fused BN+ReLU (+stats of the
    # activated tensor, which feeds block 1's bn1).
    a = im2col3x3(x, 1)
    y, s, q = fused_matmul(a, p['prep_w'], want_stats=True)
    scale, shift = bn_coeffs(s, q, N * H * W, p['prep_bn_g'], p['prep_bn_b'])
    y, s, q = pallas_bn_relu_stats(y, scale, shift)
    x = y.reshape(N, H, W, 64)
    stats = (s, q, N * H * W)

    # residual stages
    for blocks in p['stages']:
        for blk in blocks:
            x, stats = preact_block(x, stats, blk)

    # adaptive avg/max pool to (1,1) -> concat -> Linear(512, 10)
    avg, mx = pallas_global_pool(x)
    feats = jnp.concatenate([avg, mx], axis=-1).astype(jnp.bfloat16)    # (N, 512)
    Nb = feats.shape[0]
    Mp = _round_up(Nb, 8)
    if Mp != Nb:  # tiny pad so the FC tile is sublane-aligned
        feats = jnp.zeros((Mp, feats.shape[1]), jnp.bfloat16).at[:Nb].set(feats)
    logits = fused_matmul(feats, p['fc_w'], out_dtype=jnp.float32)[:Nb]
    return logits + p['fc_b'][None, :]


if __name__ == "__main__":
    x = jax.random.normal(jax.random.PRNGKey(0), (2, 3, 32, 32), jnp.float32)
    params = make_resnet18_params(jax.random.PRNGKey(42))
    logits = resnet18_forward(x, params)
    logits = jax.block_until_ready(logits)
    assert logits.shape == (2, 10), logits.shape
    assert jnp.all(jnp.isfinite(logits))
    print("KERNEL_OK")
</pallas_src>

<mosaic_0001>
module attributes {stable_mosaic.version = 11 : i64} {
  func.func @kernel(%arg0: i32, %arg1: memref<512x27xbf16, #tpu.memory_space<vmem>>, %arg2: memref<27x64xbf16, #tpu.memory_space<vmem>>, %arg3: memref<512x64xbf16, #tpu.memory_space<vmem>>, %arg4: memref<1x64xf32, #tpu.memory_space<vmem>>, %arg5: memref<1x64xf32, #tpu.memory_space<vmem>>) attributes {dimension_semantics = [#tpu.dimension_semantics<arbitrary>], iteration_bounds = array<i64: 4>, scalar_prefetch = 0 : i64, scratch_operands = 0 : i64, tpu.core_type = #tpu.core_type<tc>, window_params = [{transform_indices = @transform_0, window_bounds = array<i64: 512, 27>}, {pipeline_mode = #tpu.pipeline_mode<synchronous>, transform_indices = @transform_1, window_bounds = array<i64: 27, 64>}, {transform_indices = @transform_2, window_bounds = array<i64: 512, 64>}, {pipeline_mode = #tpu.pipeline_mode<synchronous>, transform_indices = @transform_3, window_bounds = array<i64: 1, 64>}, {pipeline_mode = #tpu.pipeline_mode<synchronous>, transform_indices = @transform_4, window_bounds = array<i64: 1, 64>}]} {
    %c0 = arith.constant 0 : index
    %c0_0 = arith.constant 0 : index
    %0 = vector.load %arg1[%c0, %c0_0] : memref<512x27xbf16, #tpu.memory_space<vmem>>, vector<512x27xbf16>
    %c0_1 = arith.constant 0 : index
    %c0_2 = arith.constant 0 : index
    %1 = vector.load %arg2[%c0_1, %c0_2] : memref<27x64xbf16, #tpu.memory_space<vmem>>, vector<27x64xbf16>
    %cst = arith.constant dense<0.000000e+00> : vector<512x64xf32>
    %2 = tpu.matmul %0, %1, %cst {dimension_numbers = #tpu.dot_dimension_numbers<[1], [0], [0], [1], [0, 0, 1, 1], [], []>} : vector<512x27xbf16>, vector<27x64xbf16>, vector<512x64xf32> -> vector<512x64xf32>
    %3 = arith.truncf %2 : vector<512x64xf32> to vector<512x64xbf16>
    %c0_3 = arith.constant 0 : index
    %c0_4 = arith.constant 0 : index
    %4 = vector.load %arg3[%c0_3, %c0_4] : memref<512x64xbf16, #tpu.memory_space<vmem>>, vector<512x64xbf16>
    tpu.vector_store %arg3[%c0_3, %c0_4], %3 {strides = array<i32>} : memref<512x64xbf16, #tpu.memory_space<vmem>>, vector<512x64xbf16>,
    %c0_i32 = arith.constant 0 : i32
    %5 = arith.cmpi eq, %arg0, %c0_i32 : i32
    %6 = arith.extui %5 : i1 to i32
    %c0_i32_5 = arith.constant 0 : i32
    %7 = arith.cmpi ne, %6, %c0_i32_5 : i32
    scf.if %7 {
      %cst_16 = arith.constant 0.000000e+00 : f32
      %19 = vector.broadcast %cst_16 : f32 to vector<1x64xf32>
      %c0_17 = arith.constant 0 : index
      %c0_18 = arith.constant 0 : index
      %20 = vector.load %arg4[%c0_17, %c0_18] : memref<1x64xf32, #tpu.memory_space<vmem>>, vector<1x64xf32>
      tpu.vector_store %arg4[%c0_17, %c0_18], %19 {strides = array<i32>} : memref<1x64xf32, #tpu.memory_space<vmem>>, vector<1x64xf32>,
      %cst_19 = arith.constant 0.000000e+00 : f32
      %21 = vector.broadcast %cst_19 : f32 to vector<1x64xf32>
      %c0_20 = arith.constant 0 : index
      %c0_21 = arith.constant 0 : index
      %22 = vector.load %arg5[%c0_20, %c0_21] : memref<1x64xf32, #tpu.memory_space<vmem>>, vector<1x64xf32>
      tpu.vector_store %arg5[%c0_20, %c0_21], %21 {strides = array<i32>} : memref<1x64xf32, #tpu.memory_space<vmem>>, vector<1x64xf32>,
    } else {
    }
    %c0_6 = arith.constant 0 : index
    %c0_7 = arith.constant 0 : index
    %8 = vector.load %arg4[%c0_6, %c0_7] : memref<1x64xf32, #tpu.memory_space<vmem>>, vector<1x64xf32>
    %cst_8 = arith.constant dense<0.000000e+00> : vector<64xf32>
    %9 = vector.multi_reduction <add>, %2, %cst_8 [0] : vector<512x64xf32> to vector<64xf32>
    %10 = vector.shape_cast %9 : vector<64xf32> to vector<1x64xf32>
    %11 = arith.addf %8, %10 : vector<1x64xf32>
    %c0_9 = arith.constant 0 : index
    %c0_10 = arith.constant 0 : index
    %12 = vector.load %arg4[%c0_9, %c0_10] : memref<1x64xf32, #tpu.memory_space<vmem>>, vector<1x64xf32>
    tpu.vector_store %arg4[%c0_9, %c0_10], %11 {strides = array<i32>} : memref<1x64xf32, #tpu.memory_space<vmem>>, vector<1x64xf32>,
    %c0_11 = arith.constant 0 : index
    %c0_12 = arith.constant 0 : index
    %13 = vector.load %arg5[%c0_11, %c0_12] : memref<1x64xf32, #tpu.memory_space<vmem>>, vector<1x64xf32>
    %14 = arith.mulf %2, %2 : vector<512x64xf32>
    %cst_13 = arith.constant dense<0.000000e+00> : vector<64xf32>
    %15 = vector.multi_reduction <add>, %14, %cst_13 [0] : vector<512x64xf32> to vector<64xf32>
    %16 = vector.shape_cast %15 : vector<64xf32> to vector<1x64xf32>
    %17 = arith.addf %13, %16 : vector<1x64xf32>
    %c0_14 = arith.constant 0 : index
    %c0_15 = arith.constant 0 : index
    %18 = vector.load %arg5[%c0_14, %c0_15] : memref<1x64xf32, #tpu.memory_space<vmem>>, vector<1x64xf32>
    tpu.vector_store %arg5[%c0_14, %c0_15], %17 {strides = array<i32>} : memref<1x64xf32, #tpu.memory_space<vmem>>, vector<1x64xf32>,
    return
  }
  func.func @transform_0(%arg0: i32) -> (i32, i32) {
    %c0_i32 = arith.constant 0 : i32
    %c0_i32_0 = arith.constant 0 : i32
    return %arg0, %c0_i32 : i32, i32
  }
  func.func @transform_1(%arg0: i32) -> (i32, i32) {
    %c0_i32 = arith.constant 0 : i32
    %c0_i32_0 = arith.constant 0 : i32
    %c0_i32_1 = arith.constant 0 : i32
    return %c0_i32, %c0_i32_0 : i32, i32
  }
  func.func @transform_2(%arg0: i32) -> (i32, i32) {
    %c0_i32 = arith.constant 0 : i32
    %c0_i32_0 = arith.constant 0 : i32
    return %arg0, %c0_i32 : i32, i32
  }
  func.func @transform_3(%arg0: i32) -> (i32, i32) {
    %c0_i32 = arith.constant 0 : i32
    %c0_i32_0 = arith.constant 0 : i32
    %c0_i32_1 = arith.constant 0 : i32
    return %c0_i32, %c0_i32_0 : i32, i32
  }
  func.func @transform_4(%arg0: i32) -> (i32, i32) {
    %c0_i32 = arith.constant 0 : i32
    %c0_i32_0 = arith.constant 0 : i32
    %c0_i32_1 = arith.constant 0 : i32
    return %c0_i32, %c0_i32_0 : i32, i32
  }
}

</mosaic_0001>

<llo_original>
// kernel: tpu_custom_call.1
$region0: #{tpu_custom_call.1}
  #allocation0 [shape = 'u32[]', space=smem, size = 0x4, offset = 0x4, fixed_abs, tag = 'smem constant byte address 0x4 - core index']
  #allocation1 [shape = 'u32[144,128]{1,0:T(1,128)}', space=vmem, size = 0x12000, scoped, tag = 'internal scratch']
  %s0 = inlined_call_operand.vmem [shape: bf16[2048,27], index: 0, kind: input, shape index: {}]
  %s1 = inlined_call_operand.vmem [shape: bf16[27,64], index: 1, kind: input, shape index: {}]
  %s2 = inlined_call_operand.vmem [shape: bf16[2048,64], index: 2, kind: output, shape index: {0}]
  %s3 = inlined_call_operand.hbm [shape: f32[1,64], index: 3, kind: output, shape index: {1}]
  %s4 = inlined_call_operand.hbm [shape: f32[1,64], index: 4, kind: output, shape index: {2}]
  %5 = xla_tuple %s2, %s3, %s4
  %s6 = sld [smem:[#allocation0]]
  $region61: #{tpu_custom_call.1} parent=0
    _
  %s8 = ssub.s32 1, %s6
  %s9 = scalar_select 0, %s8, %s6
  $region1: #{tpu_custom_call.1} parent=0
    #allocation2 [shape = 'u8[512]{0}', space=vmem, size = 0x400, scoped, tag = 'output window, operand 1, single buffered']
    #allocation3 [shape = 's32[2]{0}', space=sflag, size = 0x8, scoped, tag = 'scoped memory for tpu_custom_call.1']
    #allocation4 [shape = 'u8[512]{0}', space=vmem, size = 0x400, scoped, tag = 'output window, operand 2, single buffered']
    #allocation5 [shape = 's32[1]{0}', space=sflag, size = 0x4, scoped, tag = 'scoped memory for tpu_custom_call.1']
    %10 = vsyncpa [#allocation3], 0
    %11 = vsyncpa [#allocation5], 0
    loop: start=0, step=1, limit=6
    $region2: #{tpu_custom_call.1} parent=1 // loop_pre_header
      _
    $region3: #{tpu_custom_call.1} parent=1 // loop_header
      %s13 = sphi 0, %s17
      %p14 = scmp.ge.s32.totalorder %s13, 6
      %s23 = sphi 0, %s25
      %s26 = sphi 0, %s23
      %s27 = sphi 0, %s26
      %s43 = sphi 0, %s27
      %s47 = sphi 0, %s47
      %s49 = sphi 0, %s47
      %s50 = sphi 0, %s49
      %s64 = sphi 0, %s50
      %s70 = sphi 0, %s72
      %s73 = sphi 0, %s70
      %s74 = sphi 0, %s73
      %s90 = sphi 0, %s74
      %s94 = sphi 0, %s94
      %s96 = sphi 0, %s94
      %s97 = sphi 0, %s96
      %s111 = sphi 0, %s97
      %s115 = sphi 0, %s115
      %s117 = sphi 0, %s115
      %s118 = sphi 0, %s117
      %s132 = sphi 0, %s118
    $region4: #{tpu_custom_call.1} parent=1 // loop_header_branch
      %16 = sbr.rel (%p14) target = $region8
    $region5: #{tpu_custom_call.1} parent=1 // loop_body
      %s18 = ssub.s32 %s13, 1
      %s19 = ssub.s32 %s13, 2
      %s20 = sadd.s32 %s13, 1
      %s21 = ssub.s32 %s13, %s20
      %p22 = scmp.eq.s32.totalorder %s21, 0
      %s24 = sadd.s32 %s23, 1
      %s25 = scalar_select %p22, %s23, %s24
      %p28 = pneg %p22
      %p29 = scmp.eq.s32.totalorder %s13, 3
      %p30 = por %p28, %p29
      %p31 = scmp.ne.s32.totalorder %s23, %s26
      %p32 = scmp.eq.s32.totalorder %s13, 0
      %p33 = por %p31, %p32
      %p34 = scmp.ne.s32.totalorder %s23, %s26
      %p35 = scmp.eq.s32.totalorder %s18, 3
      %p36 = por %p34, %p35
      %p37 = scmp.ne.s32.totalorder %s26, %s27
      %p38 = scmp.eq.s32.totalorder %s18, 0
      %p39 = por %p37, %p38
      %p40 = scmp.ne.s32.totalorder %s26, %s27
      %p41 = scmp.eq.s32.totalorder %s19, 3
      %p42 = por %p40, %p41
      %p44 = scmp.ne.s32.totalorder %s27, %s43
      %p45 = scmp.eq.s32.totalorder %s19, 0
      %p46 = por %p44, %p45
      %s48 = sadd.s32 %s47, 1
      %p51 = scmp.eq.s32.totalorder %s13, 3
      %p52 = scmp.ne.s32.totalorder %s47, %s49
      %p53 = scmp.eq.s32.totalorder %s13, 0
      %p54 = por %p52, %p53
      %p55 = scmp.ne.s32.totalorder %s47, %s49
      %p56 = scmp.eq.s32.totalorder %s18, 3
      %p57 = por %p55, %p56
      %p58 = scmp.ne.s32.totalorder %s49, %s50
      %p59 = scmp.eq.s32.totalorder %s18, 0
      %p60 = por %p58, %p59
      %p61 = scmp.ne.s32.totalorder %s49, %s50
      %p62 = scmp.eq.s32.totalorder %s19, 3
      %p63 = por %p61, %p62
      %p65 = scmp.ne.s32.totalorder %s50, %s64
      %p66 = scmp.eq.s32.totalorder %s19, 0
      %p67 = por %p65, %p66
      %s68 = ssub.s32 %s13, %s20
      %p69 = scmp.eq.s32.totalorder %s68, 0
      %s71 = sadd.s32 %s70, 1
      %s72 = scalar_select %p69, %s70, %s71
      %p75 = pneg %p69
      %p76 = scmp.eq.s32.totalorder %s13, 3
      %p77 = por %p75, %p76
      %p78 = scmp.ne.s32.totalorder %s70, %s73
      %p79 = scmp.eq.s32.totalorder %s13, 0
      %p80 = por %p78, %p79
      %p81 = scmp.ne.s32.totalorder %s70, %s73
      %p82 = scmp.eq.s32.totalorder %s18, 3
      %p83 = por %p81, %p82
      %p84 = scmp.ne.s32.totalorder %s73, %s74
      %p85 = scmp.eq.s32.totalorder %s18, 0
      %p86 = por %p84, %p85
      %p87 = scmp.ne.s32.totalorder %s73, %s74
      %p88 = scmp.eq.s32.totalorder %s19, 3
      %p89 = por %p87, %p88
      %p91 = scmp.ne.s32.totalorder %s74, %s90
      %p92 = scmp.eq.s32.totalorder %s19, 0
      %p93 = por %p91, %p92
      %s95 = sadd.s32 %s94, 1
      %p98 = scmp.eq.s32.totalorder %s13, 3
      %p99 = scmp.ne.s32.totalorder %s94, %s96
      %p100 = scmp.eq.s32.totalorder %s13, 0
      %p101 = por %p99, %p100
      %p102 = scmp.ne.s32.totalorder %s94, %s96
      %p103 = scmp.eq.s32.totalorder %s18, 3
      %p104 = por %p102, %p103
      %p105 = scmp.ne.s32.totalorder %s96, %s97
      %p106 = scmp.eq.s32.totalorder %s18, 0
      %p107 = por %p105, %p106
      %p108 = scmp.ne.s32.totalorder %s96, %s97
      %p109 = scmp.eq.s32.totalorder %s19, 3
      %p110 = por %p108, %p109
      %p112 = scmp.ne.s32.totalorder %s97, %s111
      %p113 = scmp.eq.s32.totalorder %s19, 0
      %p114 = por %p112, %p113
      %s116 = sadd.s32 %s115, 1
      %p119 = scmp.eq.s32.totalorder %s13, 3
      %p120 = scmp.ne.s32.totalorder %s115, %s117
      %p121 = scmp.eq.s32.totalorder %s13, 0
      %p122 = por %p120, %p121
      %p123 = scmp.ne.s32.totalorder %s115, %s117
      %p124 = scmp.eq.s32.totalorder %s18, 3
      %p125 = por %p123, %p124
      %p126 = scmp.ne.s32.totalorder %s117, %s118
      %p127 = scmp.eq.s32.totalorder %s18, 0
      %p128 = por %p126, %p127
      %p129 = scmp.ne.s32.totalorder %s117, %s118
      %p130 = scmp.eq.s32.totalorder %s19, 3
      %p131 = por %p129, %p130
      %p133 = scmp.ne.s32.totalorder %s118, %s132
      %p134 = scmp.eq.s32.totalorder %s19, 0
      %p135 = por %p133, %p134
      %p136 = scmp.le.s32.totalorder 1, %s13
      %p137 = scmp.lt.s32.totalorder %s13, 5
      %p138 = pnand %p136, %p137
      %p139 = pneg %p138
      // Predicated region
      $region9: #{tpu_custom_call.1} parent=5 // pred_check
        _
      $region10: #{tpu_custom_call.1} parent=5 // pred_check_branch
        %141 = sbr.rel (%p138) target = $region12
      $region11: #{tpu_custom_call.1} parent=5 // pred_region
        %s142 = ssub.s32 %s13, 1
        // Predicated region
        $region13: #{tpu_custom_call.1} parent=11 // pred_check
          %p143 = pneg %p60
        $region14: #{tpu_custom_call.1} parent=11 // pred_check_branch
          %145 = sbr.rel (%p143) target = $region16
        $region15: #{tpu_custom_call.1} parent=11 // pred_region
          _
        $region16: #{tpu_custom_call.1} parent=11 // pred_fallthru
          _
      $region12: #{tpu_custom_call.1} parent=5 // pred_fallthru
        _
      %p146 = scmp.lt.s32.totalorder %s13, 4
      // Predicated region
      $region17: #{tpu_custom_call.1} parent=5 // pred_check
        %p147 = pneg %p146
      $region18: #{tpu_custom_call.1} parent=5 // pred_check_branch
        %149 = sbr.rel (%p147) target = $region20
      $region19: #{tpu_custom_call.1} parent=5 // pred_region
        // Predicated region
        $region21: #{tpu_custom_call.1} parent=19 // pred_check
          %p150 = pneg %p33
        $region22: #{tpu_custom_call.1} parent=19 // pred_check_branch
          %152 = sbr.rel (%p150) target = $region24
        $region23: #{tpu_custom_call.1} parent=19 // pred_region
          %s153 = smul.u32 64, %s13
          %p154 = scmp.lt.s32.totalorder %s153, 255
          %s155 = scalar_select %p154, %s153, 255
          %s156 = smul.addr %s155, 4
          %s157 = scalar_lea.vmem %s0, %s156
          %s158 = smul.u32 64, %s13
        $region24: #{tpu_custom_call.1} parent=19 // pred_fallthru
          _
      $region20: #{tpu_custom_call.1} parent=5 // pred_fallthru
        _
      %p159 = scmp.le.s32.totalorder 1, %s13
      %p160 = scmp.lt.s32.totalorder %s13, 5
      %p161 = pnand %p159, %p160
      %p162 = pneg %p161
      // Predicated region
      $region25: #{tpu_custom_call.1} parent=5 // pred_check
        _
      $region26: #{tpu_custom_call.1} parent=5 // pred_check_branch
        %164 = sbr.rel (%p161) target = $region28
      $region27: #{tpu_custom_call.1} parent=5 // pred_region
        %s165 = ssub.s32 %s13, 1
        %s166 = smul.u32 64, %s18
        %p167 = scmp.lt.s32.totalorder %s166, 255
        %s168 = scalar_select %p167, %s166, 255
        %s169 = smul.addr %s168, 4
        %s170 = scalar_lea.vmem %s0, %s169
        %p171 = pneg %p39
        %p172 = pneg %p36
        %p173 = pneg %p60
        %p174 = pneg %p57
        %p175 = pneg %p86
        %p176 = pneg %p83
        %s177 = smul.u32 64, %s18
        %p178 = scmp.lt.s32.totalorder %s177, 255
        %s179 = scalar_select %p178, %s177, 255
        %s180 = smul.addr %s179, 4
        %s181 = scalar_lea.vmem %s2, %s180
        %p182 = pneg %p107
        %p183 = pneg %p104
        %p184 = pneg %p128
        %p185 = pneg %p125
        %s186 = smul.u32 64, %s18
        %p187 = scmp.lt.s32.totalorder %s186, 255
        %s188 = scalar_select %p187, %s186, 255
        %s189 = smul.addr %s188, 4
        %s190 = scalar_lea.vmem %s0, %s189
        %s191 = smul.u32 64, %s18
        %s192 = smul.u32 64, %s18
        %p193 = scmp.lt.s32.totalorder %s192, 255
        %s194 = scalar_select %p193, %s192, 255
        %s195 = smul.addr %s194, 4
        %s196 = scalar_lea.vmem %s2, %s195
        %s197 = smul.u32 64, %s18
        %v199 = vld [vmem:[%s190] sm:$0xf]
        %v200 = vld [vmem:[%s190 + $0x4] sm:$0xf]
        %v201 = vld [vmem:[%s190 + $0x8] sm:$0xf]
        %v202 = vld [vmem:[%s190 + $0xc] sm:$0xf]
        %v203 = vld [vmem:[%s190 + $0x10] sm:$0xf]
        %v204 = vld [vmem:[%s190 + $0x14] sm:$0xf]
        %v205 = vld [vmem:[%s190 + $0x18] sm:$0xf]
        %v206 = vld [vmem:[%s190 + $0x1c] sm:$0xf]
        %v207 = vld [vmem:[%s190 + $0x20] sm:$0xf]
        %v208 = vld [vmem:[%s190 + $0x24] sm:$0xf]
        %v209 = vld [vmem:[%s190 + $0x28] sm:$0xf]
        %v210 = vld [vmem:[%s190 + $0x2c] sm:$0xf]
        %v211 = vld [vmem:[%s190 + $0x30] sm:$0xf]
        %v212 = vld [vmem:[%s190 + $0x34] sm:$0xf]
        %v213 = vld [vmem:[%s190 + $0x38] sm:$0xf]
        %v214 = vld [vmem:[%s190 + $0x3c] sm:$0xf]
        %v215 = vld [vmem:[%s190 + $0x40] sm:$0xf]
        %v216 = vld [vmem:[%s190 + $0x44] sm:$0xf]
        %v217 = vld [vmem:[%s190 + $0x48] sm:$0xf]
        %v218 = vld [vmem:[%s190 + $0x4c] sm:$0xf]
        %v219 = vld [vmem:[%s190 + $0x50] sm:$0xf]
        %v220 = vld [vmem:[%s190 + $0x54] sm:$0xf]
        %v221 = vld [vmem:[%s190 + $0x58] sm:$0xf]
        %v222 = vld [vmem:[%s190 + $0x5c] sm:$0xf]
        %v223 = vld [vmem:[%s190 + $0x60] sm:$0xf]
        %v224 = vld [vmem:[%s190 + $0x64] sm:$0xf]
        %v225 = vld [vmem:[%s190 + $0x68] sm:$0xf]
        %v226 = vld [vmem:[%s190 + $0x6c] sm:$0xf]
        %v227 = vld [vmem:[%s190 + $0x70] sm:$0xf]
        %v228 = vld [vmem:[%s190 + $0x74] sm:$0xf]
        %v229 = vld [vmem:[%s190 + $0x78] sm:$0xf]
        %v230 = vld [vmem:[%s190 + $0x7c] sm:$0xf]
        %v231 = vld [vmem:[%s190 + $0x80] sm:$0xf]
        %v232 = vld [vmem:[%s190 + $0x84] sm:$0xf]
        %v233 = vld [vmem:[%s190 + $0x88] sm:$0xf]
        %v234 = vld [vmem:[%s190 + $0x8c] sm:$0xf]
        %v235 = vld [vmem:[%s190 + $0x90] sm:$0xf]
        %v236 = vld [vmem:[%s190 + $0x94] sm:$0xf]
        %v237 = vld [vmem:[%s190 + $0x98] sm:$0xf]
        %v238 = vld [vmem:[%s190 + $0x9c] sm:$0xf]
        %v239 = vld [vmem:[%s190 + $0xa0] sm:$0xf]
        %v240 = vld [vmem:[%s190 + $0xa4] sm:$0xf]
        %v241 = vld [vmem:[%s190 + $0xa8] sm:$0xf]
        %v242 = vld [vmem:[%s190 + $0xac] sm:$0xf]
        %v243 = vld [vmem:[%s190 + $0xb0] sm:$0xf]
        %v244 = vld [vmem:[%s190 + $0xb4] sm:$0xf]
        %v245 = vld [vmem:[%s190 + $0xb8] sm:$0xf]
        %v246 = vld [vmem:[%s190 + $0xbc] sm:$0xf]
        %v247 = vld [vmem:[%s190 + $0xc0] sm:$0xf]
        %v248 = vld [vmem:[%s190 + $0xc4] sm:$0xf]
        %v249 = vld [vmem:[%s190 + $0xc8] sm:$0xf]
        %v250 = vld [vmem:[%s190 + $0xcc] sm:$0xf]
        %v251 = vld [vmem:[%s190 + $0xd0] sm:$0xf]
        %v252 = vld [vmem:[%s190 + $0xd4] sm:$0xf]
        %v253 = vld [vmem:[%s190 + $0xd8] sm:$0xf]
        %v254 = vld [vmem:[%s190 + $0xdc] sm:$0xf]
        %v255 = vld [vmem:[%s190 + $0xe0] sm:$0xf]
        %v256 = vld [vmem:[%s190 + $0xe4] sm:$0xf]
        %v257 = vld [vmem:[%s190 + $0xe8] sm:$0xf]
        %v258 = vld [vmem:[%s190 + $0xec] sm:$0xf]
        %v259 = vld [vmem:[%s190 + $0xf0] sm:$0xf]
        %v260 = vld [vmem:[%s190 + $0xf4] sm:$0xf]
        %v261 = vld [vmem:[%s190 + $0xf8] sm:$0xf]
        %v262 = vld [vmem:[%s190 + $0xfc] sm:$0xf]
        %v263 = vld [vmem:[%s1] sm:$0xf]
        %v264 = vld [vmem:[%s1 + $0x4] sm:$0xf]
        %v265 = vld [vmem:[%s1 + $0x8] sm:$0xf]
        %v266 = vld [vmem:[%s1 + $0xc] sm:$0x3]
        %v331 = vunpack.c.l.b16 %v199
        %v332 = vunpack.c.l.b16 %v200
        %v333 = vunpack.c.l.b16 %v201
        %v334 = vunpack.c.l.b16 %v202
        %v335 = vunpack.c.l.b16 %v203
        %v336 = vunpack.c.l.b16 %v204
        %v337 = vunpack.c.l.b16 %v205
        %v338 = vunpack.c.l.b16 %v206
        %v339 = vunpack.c.l.b16 %v207
        %v340 = vunpack.c.l.b16 %v208
        %v341 = vunpack.c.l.b16 %v209
        %v342 = vunpack.c.l.b16 %v210
        %v343 = vunpack.c.l.b16 %v211
        %v344 = vunpack.c.l.b16 %v212
        %v345 = vunpack.c.l.b16 %v213
        %v346 = vunpack.c.l.b16 %v214
        %v347 = vunpack.c.l.b16 %v215
        %v348 = vunpack.c.l.b16 %v216
        %v349 = vunpack.c.l.b16 %v217
        %v350 = vunpack.c.l.b16 %v218
        %v351 = vunpack.c.l.b16 %v219
        %v352 = vunpack.c.l.b16 %v220
        %v353 = vunpack.c.l.b16 %v221
        %v354 = vunpack.c.l.b16 %v222
        %v355 = vunpack.c.l.b16 %v223
        %v356 = vunpack.c.l.b16 %v224
        %v357 = vunpack.c.l.b16 %v225
        %v358 = vunpack.c.l.b16 %v226
        %v359 = vunpack.c.l.b16 %v227
        %v360 = vunpack.c.l.b16 %v228
        %v361 = vunpack.c.l.b16 %v229
        %v362 = vunpack.c.l.b16 %v230
        %v363 = vunpack.c.l.b16 %v231
        %v364 = vunpack.c.l.b16 %v232
        %v365 = vunpack.c.l.b16 %v233
        %v366 = vunpack.c.l.b16 %v234
        %v367 = vunpack.c.l.b16 %v235
        %v368 = vunpack.c.l.b16 %v236
        %v369 = vunpack.c.l.b16 %v237
        %v370 = vunpack.c.l.b16 %v238
        %v371 = vunpack.c.l.b16 %v239
        %v372 = vunpack.c.l.b16 %v240
        %v373 = vunpack.c.l.b16 %v241
        %v374 = vunpack.c.l.b16 %v242
        %v375 = vunpack.c.l.b16 %v243
        %v376 = vunpack.c.l.b16 %v244
        %v377 = vunpack.c.l.b16 %v245
        %v378 = vunpack.c.l.b16 %v246
        %v379 = vunpack.c.l.b16 %v247
        %v380 = vunpack.c.l.b16 %v248
        %v381 = vunpack.c.l.b16 %v249
        %v382 = vunpack.c.l.b16 %v250
        %v383 = vunpack.c.l.b16 %v251
        %v384 = vunpack.c.l.b16 %v252
        %v385 = vunpack.c.l.b16 %v253
        %v386 = vunpack.c.l.b16 %v254
        %v387 = vunpack.c.l.b16 %v255
        %v388 = vunpack.c.l.b16 %v256
        %v389 = vunpack.c.l.b16 %v257
        %v390 = vunpack.c.l.b16 %v258
        %v391 = vunpack.c.l.b16 %v259
        %v392 = vunpack.c.l.b16 %v260
        %v393 = vunpack.c.l.b16 %v261
        %v394 = vunpack.c.l.b16 %v262
        %v395 = vpack.c.b16 %v332, %v331
        %v396 = vpack.c.b16 %v334, %v333
        %v397 = vpack.c.b16 %v336, %v335
        %v398 = vpack.c.b16 %v338, %v337
        %v399 = vpack.c.b16 %v340, %v339
        %v400 = vpack.c.b16 %v342, %v341
        %v401 = vpack.c.b16 %v344, %v343
        %v402 = vpack.c.b16 %v346, %v345
        %v403 = vpack.c.b16 %v348, %v347
        %v404 = vpack.c.b16 %v350, %v349
        %v405 = vpack.c.b16 %v352, %v351
        %v406 = vpack.c.b16 %v354, %v353
        %v407 = vpack.c.b16 %v356, %v355
        %v408 = vpack.c.b16 %v358, %v357
        %v409 = vpack.c.b16 %v360, %v359
        %v410 = vpack.c.b16 %v362, %v361
        %v411 = vpack.c.b16 %v364, %v363
        %v412 = vpack.c.b16 %v366, %v365
        %v413 = vpack.c.b16 %v368, %v367
        %v414 = vpack.c.b16 %v370, %v369
        %v415 = vpack.c.b16 %v372, %v371
        %v416 = vpack.c.b16 %v374, %v373
        %v417 = vpack.c.b16 %v376, %v375
        %v418 = vpack.c.b16 %v378, %v377
        %v419 = vpack.c.b16 %v380, %v379
        %v420 = vpack.c.b16 %v382, %v381
        %v421 = vpack.c.b16 %v384, %v383
        %v422 = vpack.c.b16 %v386, %v385
        %v423 = vpack.c.b16 %v388, %v387
        %v424 = vpack.c.b16 %v390, %v389
        %v425 = vpack.c.b16 %v392, %v391
        %v426 = vpack.c.b16 %v394, %v393
        %v431 = vunpack.c.l.b16 %v263
        %v432 = vunpack.c.l.b16 %v264
        %v433 = vunpack.c.l.b16 %v265
        %v434 = vunpack.c.l.b16 %v266
        %v435 = vpack.c.b16 %v432, %v431
        %v436 = vpack.c.b16 %v434, %v433
        %vm438 = vcmask 220160
        %v440 = vsel %vm438, %v395, 0
        %v443 = vsel %vm438, %v396, 0
        %v446 = vsel %vm438, %v397, 0
        %v449 = vsel %vm438, %v398, 0
        %v452 = vsel %vm438, %v399, 0
        %v455 = vsel %vm438, %v400, 0
        %v458 = vsel %vm438, %v401, 0
        %v461 = vsel %vm438, %v402, 0
        %v464 = vsel %vm438, %v403, 0
        %v467 = vsel %vm438, %v404, 0
        %v470 = vsel %vm438, %v405, 0
        %v473 = vsel %vm438, %v406, 0
        %v476 = vsel %vm438, %v407, 0
        %v479 = vsel %vm438, %v408, 0
        %v482 = vsel %vm438, %v409, 0
        %v485 = vsel %vm438, %v410, 0
        %v488 = vsel %vm438, %v411, 0
        %v491 = vsel %vm438, %v412, 0
        %v494 = vsel %vm438, %v413, 0
        %v497 = vsel %vm438, %v414, 0
        %v500 = vsel %vm438, %v415, 0
        %v503 = vsel %vm438, %v416, 0
        %v506 = vsel %vm438, %v417, 0
        %v509 = vsel %vm438, %v418, 0
        %v512 = vsel %vm438, %v419, 0
        %v515 = vsel %vm438, %v420, 0
        %v518 = vsel %vm438, %v421, 0
        %v521 = vsel %vm438, %v422, 0
        %v524 = vsel %vm438, %v423, 0
        %v527 = vsel %vm438, %v424, 0
        %v530 = vsel %vm438, %v425, 0
        %v533 = vsel %vm438, %v426, 0
        %vm535 = vcmask 1044480
        %vm536 = vcmask 1045504
        %v537 = vsel %vm535, 4294967295, 65535
        %v538 = vsel %vm536, %v537, 0
        %v540 = vand.u32 %v436, %v538
        %542 = vmatprep.subr.bf16.mxu0 0
        %543 = vmatpush1.bf16.msra.mxu0 %v435
        %544 = vmatprep.subr.bf16.mxu0 0
        %545 = vmatpush1.bf16.msra.mxu0 %v540
        %546 = vmatprep.subr.bf16.mxu0 0
        %547 = vmatpush1.bf16.msra.mxu0 0
        %548 = vmatprep.subr.bf16.mxu0 0
        %549 = vmatpush1.bf16.msra.mxu0 0
        %550 = vmatprep.subr.bf16.mxu0 0
        %551 = vmatpush1.bf16.msra.mxu0 0
        %552 = vmatprep.subr.bf16.mxu0 0
        %553 = vmatpush1.bf16.msra.mxu0 0
        %554 = vmatprep.subr.bf16.mxu0 0
        %555 = vmatpush1.bf16.msra.mxu0 0
        %556 = vmatprep.subr.bf16.mxu0 0
        %557 = vmatpush1.bf16.msra.mxu0 0
        %558 = vmatprep.subr.bf16.mxu0 0
        %559 = vmatpush1.bf16.msra.mxu0 0
        %560 = vmatprep.subr.bf16.mxu0 0
        %561 = vmatpush1.bf16.msra.mxu0 0
        %562 = vmatprep.subr.bf16.mxu0 0
        %563 = vmatpush1.bf16.msra.mxu0 0
        %564 = vmatprep.subr.bf16.mxu0 0
        %565 = vmatpush1.bf16.msra.mxu0 0
        %566 = vmatprep.subr.bf16.mxu0 0
        %567 = vmatpush1.bf16.msra.mxu0 0
        %568 = vmatprep.subr.bf16.mxu0 0
        %569 = vmatpush1.bf16.msra.mxu0 0
        %570 = vmatprep.subr.bf16.mxu0 0
        %571 = vmatpush1.bf16.msra.mxu0 0
        %572 = vmatprep.subr.bf16.mxu0 0
        %573 = vmatpush1.bf16.msra.mxu0 0
        %574 = vmatprep.mubr.bf16.mxu0 0
        %575 = vmatmul.mubr.bf16.gmra.mrb[0].mxu0 %v440
        %v576 = vpop.f32.mrb[0].mxu0
        %v577 = vadd.f32 0.0, %v576
        %v578 = vpop.f32.mrb[0].mxu0
        %v579 = vpop.f32.mrb[0].mxu0
        %v580 = vadd.f32 0.0, %v579
        %v581 = vpop.f32.mrb[0].mxu0
        %582 = vmatprep.mubr.bf16.mxu0 0
        %583 = vmatmul.mubr.bf16.gmra.mrb[0].mxu0 %v443
        %v584 = vpop.f32.mrb[0].mxu0
        %v585 = vadd.f32 0.0, %v584
        %v586 = vpop.f32.mrb[0].mxu0
        %v587 = vpop.f32.mrb[0].mxu0
        %v588 = vadd.f32 0.0, %v587
        %v589 = vpop.f32.mrb[0].mxu0
        %590 = vmatprep.mubr.bf16.mxu0 0
        %591 = vmatmul.mubr.bf16.gmra.mrb[0].mxu0 %v446
        %v592 = vpop.f32.mrb[0].mxu0
        %v593 = vadd.f32 0.0, %v592
        %v594 = vpop.f32.mrb[0].mxu0
        %v595 = vpop.f32.mrb[0].mxu0
        %v596 = vadd.f32 0.0, %v595
        %v597 = vpop.f32.mrb[0].mxu0
        %598 = vmatprep.mubr.bf16.mxu0 0
        %599 = vmatmul.mubr.bf16.gmra.mrb[0].mxu0 %v449
        %v600 = vpop.f32.mrb[0].mxu0
        %v601 = vadd.f32 0.0, %v600
        %v602 = vpop.f32.mrb[0].mxu0
        %v603 = vpop.f32.mrb[0].mxu0
        %v604 = vadd.f32 0.0, %v603
        %v605 = vpop.f32.mrb[0].mxu0
        %606 = vmatprep.mubr.bf16.mxu0 0
        %607 = vmatmul.mubr.bf16.gmra.mrb[0].mxu0 %v452
        %v608 = vpop.f32.mrb[0].mxu0
        %v609 = vadd.f32 0.0, %v608
        %v610 = vpop.f32.mrb[0].mxu0
        %v611 = vpop.f32.mrb[0].mxu0
        %v612 = vadd.f32 0.0, %v611
        %v613 = vpop.f32.mrb[0].mxu0
        %614 = vmatprep.mubr.bf16.mxu0 0
        %615 = vmatmul.mubr.bf16.gmra.mrb[0].mxu0 %v455
        %v616 = vpop.f32.mrb[0].mxu0
        %v617 = vadd.f32 0.0, %v616
        %v618 = vpop.f32.mrb[0].mxu0
        %v619 = vpop.f32.mrb[0].mxu0
        %v620 = vadd.f32 0.0, %v619
        %v621 = vpop.f32.mrb[0].mxu0
        %622 = vmatprep.mubr.bf16.mxu0 0
        %623 = vmatmul.mubr.bf16.gmra.mrb[0].mxu0 %v458
        %v624 = vpop.f32.mrb[0].mxu0
        %v625 = vadd.f32 0.0, %v624
        %v626 = vpop.f32.mrb[0].mxu0
        %v627 = vpop.f32.mrb[0].mxu0
        %v628 = vadd.f32 0.0, %v627
        %v629 = vpop.f32.mrb[0].mxu0
        %630 = vmatprep.mubr.bf16.mxu0 0
        %631 = vmatmul.mubr.bf16.gmra.mrb[0].mxu0 %v461
        %v632 = vpop.f32.mrb[0].mxu0
        %v633 = vadd.f32 0.0, %v632
        %v634 = vpop.f32.mrb[0].mxu0
        %v635 = vpop.f32.mrb[0].mxu0
        %v636 = vadd.f32 0.0, %v635
        %v637 = vpop.f32.mrb[0].mxu0
        %638 = vmatprep.mubr.bf16.mxu0 0
        %639 = vmatmul.mubr.bf16.gmra.mrb[0].mxu0 %v464
        %v640 = vpop.f32.mrb[0].mxu0
        %v641 = vadd.f32 0.0, %v640
        %v642 = vpop.f32.mrb[0].mxu0
        %v643 = vpop.f32.mrb[0].mxu0
        %v644 = vadd.f32 0.0, %v643
        %v645 = vpop.f32.mrb[0].mxu0
        %646 = vmatprep.mubr.bf16.mxu0 0
        %647 = vmatmul.mubr.bf16.gmra.mrb[0].mxu0 %v467
        %v648 = vpop.f32.mrb[0].mxu0
        %v649 = vadd.f32 0.0, %v648
        %v650 = vpop.f32.mrb[0].mxu0
        %v651 = vpop.f32.mrb[0].mxu0
        %v652 = vadd.f32 0.0, %v651
        %v653 = vpop.f32.mrb[0].mxu0
        %654 = vmatprep.mubr.bf16.mxu0 0
        %655 = vmatmul.mubr.bf16.gmra.mrb[0].mxu0 %v470
        %v656 = vpop.f32.mrb[0].mxu0
        %v657 = vadd.f32 0.0, %v656
        %v658 = vpop.f32.mrb[0].mxu0
        %v659 = vpop.f32.mrb[0].mxu0
        %v660 = vadd.f32 0.0, %v659
        %v661 = vpop.f32.mrb[0].mxu0
        %662 = vmatprep.mubr.bf16.mxu0 0
        %663 = vmatmul.mubr.bf16.gmra.mrb[0].mxu0 %v473
        %v664 = vpop.f32.mrb[0].mxu0
        %v665 = vadd.f32 0.0, %v664
        %v666 = vpop.f32.mrb[0].mxu0
        %v667 = vpop.f32.mrb[0].mxu0
        %v668 = vadd.f32 0.0, %v667
        %v669 = vpop.f32.mrb[0].mxu0
        %670 = vmatprep.mubr.bf16.mxu0 0
        %671 = vmatmul.mubr.bf16.gmra.mrb[0].mxu0 %v476
        %v672 = vpop.f32.mrb[0].mxu0
        %v673 = vadd.f32 0.0, %v672
        %v674 = vpop.f32.mrb[0].mxu0
        %v675 = vpop.f32.mrb[0].mxu0
        %v676 = vadd.f32 0.0, %v675
        %v677 = vpop.f32.mrb[0].mxu0
        %678 = vmatprep.mubr.bf16.mxu0 0
        %679 = vmatmul.mubr.bf16.gmra.mrb[0].mxu0 %v479
        %v680 = vpop.f32.mrb[0].mxu0
        %v681 = vadd.f32 0.0, %v680
        %v682 = vpop.f32.mrb[0].mxu0
        %v683 = vpop.f32.mrb[0].mxu0
        %v684 = vadd.f32 0.0, %v683
        %v685 = vpop.f32.mrb[0].mxu0
        %686 = vmatprep.mubr.bf16.mxu0 0
        %687 = vmatmul.mubr.bf16.gmra.mrb[0].mxu0 %v482
        %v688 = vpop.f32.mrb[0].mxu0
        %v689 = vadd.f32 0.0, %v688
        %v690 = vpop.f32.mrb[0].mxu0
        %v691 = vpop.f32.mrb[0].mxu0
        %v692 = vadd.f32 0.0, %v691
        %v693 = vpop.f32.mrb[0].mxu0
        %694 = vmatprep.mubr.bf16.mxu0 0
        %695 = vmatmul.mubr.bf16.gmra.mrb[0].mxu0 %v485
        %v696 = vpop.f32.mrb[0].mxu0
        %v697 = vadd.f32 0.0, %v696
        %v698 = vpop.f32.mrb[0].mxu0
        %v699 = vpop.f32.mrb[0].mxu0
        %v700 = vadd.f32 0.0, %v699
        %v701 = vpop.f32.mrb[0].mxu0
        %702 = vmatprep.mubr.bf16.mxu0 0
        %703 = vmatmul.mubr.bf16.gmra.mrb[0].mxu0 %v488
        %v704 = vpop.f32.mrb[0].mxu0
        %v705 = vadd.f32 0.0, %v704
        %v706 = vpop.f32.mrb[0].mxu0
        %v707 = vpop.f32.mrb[0].mxu0
        %v708 = vadd.f32 0.0, %v707
        %v709 = vpop.f32.mrb[0].mxu0
        %710 = vmatprep.mubr.bf16.mxu0 0
        %711 = vmatmul.mubr.bf16.gmra.mrb[0].mxu0 %v491
        %v712 = vpop.f32.mrb[0].mxu0
        %v713 = vadd.f32 0.0, %v712
        %v714 = vpop.f32.mrb[0].mxu0
        %v715 = vpop.f32.mrb[0].mxu0
        %v716 = vadd.f32 0.0, %v715
        %v717 = vpop.f32.mrb[0].mxu0
        %718 = vmatprep.mubr.bf16.mxu0 0
        %719 = vmatmul.mubr.bf16.gmra.mrb[0].mxu0 %v494
        %v720 = vpop.f32.mrb[0].mxu0
        %v721 = vadd.f32 0.0, %v720
        %v722 = vpop.f32.mrb[0].mxu0
        %v723 = vpop.f32.mrb[0].mxu0
        %v724 = vadd.f32 0.0, %v723
        %v725 = vpop.f32.mrb[0].mxu0
        %726 = vmatprep.mubr.bf16.mxu0 0
        %727 = vmatmul.mubr.bf16.gmra.mrb[0].mxu0 %v497
        %v728 = vpop.f32.mrb[0].mxu0
        %v729 = vadd.f32 0.0, %v728
        %v730 = vpop.f32.mrb[0].mxu0
        %v731 = vpop.f32.mrb[0].mxu0
        %v732 = vadd.f32 0.0, %v731
        %v733 = vpop.f32.mrb[0].mxu0
        %734 = vmatprep.mubr.bf16.mxu0 0
        %735 = vmatmul.mubr.bf16.gmra.mrb[0].mxu0 %v500
        %v736 = vpop.f32.mrb[0].mxu0
        %v737 = vadd.f32 0.0, %v736
        %v738 = vpop.f32.mrb[0].mxu0
        %v739 = vpop.f32.mrb[0].mxu0
        %v740 = vadd.f32 0.0, %v739
        %v741 = vpop.f32.mrb[0].mxu0
        %742 = vmatprep.mubr.bf16.mxu0 0
        %743 = vmatmul.mubr.bf16.gmra.mrb[0].mxu0 %v503
        %v744 = vpop.f32.mrb[0].mxu0
        %v745 = vadd.f32 0.0, %v744
        %v746 = vpop.f32.mrb[0].mxu0
        %v747 = vpop.f32.mrb[0].mxu0
        %v748 = vadd.f32 0.0, %v747
        %v749 = vpop.f32.mrb[0].mxu0
        %750 = vmatprep.mubr.bf16.mxu0 0
        %751 = vmatmul.mubr.bf16.gmra.mrb[0].mxu0 %v506
        %v752 = vpop.f32.mrb[0].mxu0
        %v753 = vadd.f32 0.0, %v752
        %v754 = vpop.f32.mrb[0].mxu0
        %v755 = vpop.f32.mrb[0].mxu0
        %v756 = vadd.f32 0.0, %v755
        %v757 = vpop.f32.mrb[0].mxu0
        %758 = vmatprep.mubr.bf16.mxu0 0
        %759 = vmatmul.mubr.bf16.gmra.mrb[0].mxu0 %v509
        %v760 = vpop.f32.mrb[0].mxu0
        %v761 = vadd.f32 0.0, %v760
        %v762 = vpop.f32.mrb[0].mxu0
        %v763 = vpop.f32.mrb[0].mxu0
        %v764 = vadd.f32 0.0, %v763
        %v765 = vpop.f32.mrb[0].mxu0
        %766 = vmatprep.mubr.bf16.mxu0 0
        %767 = vmatmul.mubr.bf16.gmra.mrb[0].mxu0 %v512
        %v768 = vpop.f32.mrb[0].mxu0
        %v769 = vadd.f32 0.0, %v768
        %v770 = vpop.f32.mrb[0].mxu0
        %v771 = vpop.f32.mrb[0].mxu0
        %v772 = vadd.f32 0.0, %v771
        %v773 = vpop.f32.mrb[0].mxu0
        %774 = vmatprep.mubr.bf16.mxu0 0
        %775 = vmatmul.mubr.bf16.gmra.mrb[0].mxu0 %v515
        %v776 = vpop.f32.mrb[0].mxu0
        %v777 = vadd.f32 0.0, %v776
        %v778 = vpop.f32.mrb[0].mxu0
        %v779 = vpop.f32.mrb[0].mxu0
        %v780 = vadd.f32 0.0, %v779
        %v781 = vpop.f32.mrb[0].mxu0
        %782 = vmatprep.mubr.bf16.mxu0 0
        %783 = vmatmul.mubr.bf16.gmra.mrb[0].mxu0 %v518
        %v784 = vpop.f32.mrb[0].mxu0
        %v785 = vadd.f32 0.0, %v784
        %v786 = vpop.f32.mrb[0].mxu0
        %v787 = vpop.f32.mrb[0].mxu0
        %v788 = vadd.f32 0.0, %v787
        %v789 = vpop.f32.mrb[0].mxu0
        %790 = vmatprep.mubr.bf16.mxu0 0
        %791 = vmatmul.mubr.bf16.gmra.mrb[0].mxu0 %v521
        %v792 = vpop.f32.mrb[0].mxu0
        %v793 = vadd.f32 0.0, %v792
        %v794 = vpop.f32.mrb[0].mxu0
        %v795 = vpop.f32.mrb[0].mxu0
        %v796 = vadd.f32 0.0, %v795
        %v797 = vpop.f32.mrb[0].mxu0
        %798 = vmatprep.mubr.bf16.mxu0 0
        %799 = vmatmul.mubr.bf16.gmra.mrb[0].mxu0 %v524
        %v800 = vpop.f32.mrb[0].mxu0
        %v801 = vadd.f32 0.0, %v800
        %v802 = vpop.f32.mrb[0].mxu0
        %v803 = vpop.f32.mrb[0].mxu0
        %v804 = vadd.f32 0.0, %v803
        %v805 = vpop.f32.mrb[0].mxu0
        %806 = vmatprep.mubr.bf16.mxu0 0
        %807 = vmatmul.mubr.bf16.gmra.mrb[0].mxu0 %v527
        %v808 = vpop.f32.mrb[0].mxu0
        %v809 = vadd.f32 0.0, %v808
        %v810 = vpop.f32.mrb[0].mxu0
        %v811 = vpop.f32.mrb[0].mxu0
        %v812 = vadd.f32 0.0, %v811
        %v813 = vpop.f32.mrb[0].mxu0
        %814 = vmatprep.mubr.bf16.mxu0 0
        %815 = vmatmul.mubr.bf16.gmra.mrb[0].mxu0 %v530
        %v816 = vpop.f32.mrb[0].mxu0
        %v817 = vadd.f32 0.0, %v816
        %v818 = vpop.f32.mrb[0].mxu0
        %v819 = vpop.f32.mrb[0].mxu0
        %v820 = vadd.f32 0.0, %v819
        %v821 = vpop.f32.mrb[0].mxu0
        %822 = vmatprep.mubr.bf16.mxu0 0
        %823 = vmatmul.mubr.bf16.gmra.mrb[0].mxu0 %v533
        %v824 = vpop.f32.mrb[0].mxu0
        %v825 = vadd.f32 0.0, %v824
        %v826 = vpop.f32.mrb[0].mxu0
        %v827 = vpop.f32.mrb[0].mxu0
        %v828 = vadd.f32 0.0, %v827
        %v829 = vpop.f32.mrb[0].mxu0
        %830 = vdwg.mxu0
        %v831 = vpack.c.bf16 %v580, %v577
        %v832 = vpack.c.bf16 %v588, %v585
        %v833 = vpack.c.bf16 %v596, %v593
        %v834 = vpack.c.bf16 %v604, %v601
        %v835 = vpack.c.bf16 %v612, %v609
        %v836 = vpack.c.bf16 %v620, %v617
        %v837 = vpack.c.bf16 %v628, %v625
        %v838 = vpack.c.bf16 %v636, %v633
        %v839 = vpack.c.bf16 %v644, %v641
        %v840 = vpack.c.bf16 %v652, %v649
        %v841 = vpack.c.bf16 %v660, %v657
        %v842 = vpack.c.bf16 %v668, %v665
        %v843 = vpack.c.bf16 %v676, %v673
        %v844 = vpack.c.bf16 %v684, %v681
        %v845 = vpack.c.bf16 %v692, %v689
        %v846 = vpack.c.bf16 %v700, %v697
        %v847 = vpack.c.bf16 %v708, %v705
        %v848 = vpack.c.bf16 %v716, %v713
        %v849 = vpack.c.bf16 %v724, %v721
        %v850 = vpack.c.bf16 %v732, %v729
        %v851 = vpack.c.bf16 %v740, %v737
        %v852 = vpack.c.bf16 %v748, %v745
        %v853 = vpack.c.bf16 %v756, %v753
        %v854 = vpack.c.bf16 %v764, %v761
        %v855 = vpack.c.bf16 %v772, %v769
        %v856 = vpack.c.bf16 %v780, %v777
        %v857 = vpack.c.bf16 %v788, %v785
        %v858 = vpack.c.bf16 %v796, %v793
        %v859 = vpack.c.bf16 %v804, %v801
        %v860 = vpack.c.bf16 %v812, %v809
        %v861 = vpack.c.bf16 %v820, %v817
        %v862 = vpack.c.bf16 %v828, %v825
        %v895 = vunpack.c.l.b16 %v831
        %v896 = vunpack.c.h.b16 %v831
        %v897 = vunpack.c.l.b16 %v832
        %v898 = vunpack.c.h.b16 %v832
        %v899 = vunpack.c.l.b16 %v833
        %v900 = vunpack.c.h.b16 %v833
        %v901 = vunpack.c.l.b16 %v834
        %v902 = vunpack.c.h.b16 %v834
        %v903 = vunpack.c.l.b16 %v835
        %v904 = vunpack.c.h.b16 %v835
        %v905 = vunpack.c.l.b16 %v836
        %v906 = vunpack.c.h.b16 %v836
        %v907 = vunpack.c.l.b16 %v837
        %v908 = vunpack.c.h.b16 %v837
        %v909 = vunpack.c.l.b16 %v838
        %v910 = vunpack.c.h.b16 %v838
        %v911 = vunpack.c.l.b16 %v839
        %v912 = vunpack.c.h.b16 %v839
        %v913 = vunpack.c.l.b16 %v840
        %v914 = vunpack.c.h.b16 %v840
        %v915 = vunpack.c.l.b16 %v841
        %v916 = vunpack.c.h.b16 %v841
        %v917 = vunpack.c.l.b16 %v842
        %v918 = vunpack.c.h.b16 %v842
        %v919 = vunpack.c.l.b16 %v843
        %v920 = vunpack.c.h.b16 %v843
        %v921 = vunpack.c.l.b16 %v844
        %v922 = vunpack.c.h.b16 %v844
        %v923 = vunpack.c.l.b16 %v845
        %v924 = vunpack.c.h.b16 %v845
        %v925 = vunpack.c.l.b16 %v846
        %v926 = vunpack.c.h.b16 %v846
        %v927 = vunpack.c.l.b16 %v847
        %v928 = vunpack.c.h.b16 %v847
        %v929 = vunpack.c.l.b16 %v848
        %v930 = vunpack.c.h.b16 %v848
        %v931 = vunpack.c.l.b16 %v849
        %v932 = vunpack.c.h.b16 %v849
        %v933 = vunpack.c.l.b16 %v850
        %v934 = vunpack.c.h.b16 %v850
        %v935 = vunpack.c.l.b16 %v851
        %v936 = vunpack.c.h.b16 %v851
        %v937 = vunpack.c.l.b16 %v852
        %v938 = vunpack.c.h.b16 %v852
        %v939 = vunpack.c.l.b16 %v853
        %v940 = vunpack.c.h.b16 %v853
        %v941 = vunpack.c.l.b16 %v854
        %v942 = vunpack.c.h.b16 %v854
        %v943 = vunpack.c.l.b16 %v855
        %v944 = vunpack.c.h.b16 %v855
        %v945 = vunpack.c.l.b16 %v856
        %v946 = vunpack.c.h.b16 %v856
        %v947 = vunpack.c.l.b16 %v857
        %v948 = vunpack.c.h.b16 %v857
        %v949 = vunpack.c.l.b16 %v858
        %v950 = vunpack.c.h.b16 %v858
        %v951 = vunpack.c.l.b16 %v859
        %v952 = vunpack.c.h.b16 %v859
        %v953 = vunpack.c.l.b16 %v860
        %v954 = vunpack.c.h.b16 %v860
        %v955 = vunpack.c.l.b16 %v861
        %v956 = vunpack.c.h.b16 %v861
        %v957 = vunpack.c.l.b16 %v862
        %v958 = vunpack.c.h.b16 %v862
        %v959 = vpack.c.b16 %v895, %v895
        %v960 = vpack.c.b16 %v896, %v896
        %v961 = vpack.c.b16 %v897, %v897
        %v962 = vpack.c.b16 %v898, %v898
        %v963 = vpack.c.b16 %v899, %v899
        %v964 = vpack.c.b16 %v900, %v900
        %v965 = vpack.c.b16 %v901, %v901
        %v966 = vpack.c.b16 %v902, %v902
        %v967 = vpack.c.b16 %v903, %v903
        %v968 = vpack.c.b16 %v904, %v904
        %v969 = vpack.c.b16 %v905, %v905
        %v970 = vpack.c.b16 %v906, %v906
        %v971 = vpack.c.b16 %v907, %v907
        %v972 = vpack.c.b16 %v908, %v908
        %v973 = vpack.c.b16 %v909, %v909
        %v974 = vpack.c.b16 %v910, %v910
        %v975 = vpack.c.b16 %v911, %v911
        %v976 = vpack.c.b16 %v912, %v912
        %v977 = vpack.c.b16 %v913, %v913
        %v978 = vpack.c.b16 %v914, %v914
        %v979 = vpack.c.b16 %v915, %v915
        %v980 = vpack.c.b16 %v916, %v916
        %v981 = vpack.c.b16 %v917, %v917
        %v982 = vpack.c.b16 %v918, %v918
        %v983 = vpack.c.b16 %v919, %v919
        %v984 = vpack.c.b16 %v920, %v920
        %v985 = vpack.c.b16 %v921, %v921
        %v986 = vpack.c.b16 %v922, %v922
        %v987 = vpack.c.b16 %v923, %v923
        %v988 = vpack.c.b16 %v924, %v924
        %v989 = vpack.c.b16 %v925, %v925
        %v990 = vpack.c.b16 %v926, %v926
        %v991 = vpack.c.b16 %v927, %v927
        %v992 = vpack.c.b16 %v928, %v928
        %v993 = vpack.c.b16 %v929, %v929
        %v994 = vpack.c.b16 %v930, %v930
        %v995 = vpack.c.b16 %v931, %v931
        %v996 = vpack.c.b16 %v932, %v932
        %v997 = vpack.c.b16 %v933, %v933
        %v998 = vpack.c.b16 %v934, %v934
        %v999 = vpack.c.b16 %v935, %v935
        %v1000 = vpack.c.b16 %v936, %v936
        %v1001 = vpack.c.b16 %v937, %v937
        %v1002 = vpack.c.b16 %v938, %v938
        %v1003 = vpack.c.b16 %v939, %v939
        %v1004 = vpack.c.b16 %v940, %v940
        %v1005 = vpack.c.b16 %v941, %v941
        %v1006 = vpack.c.b16 %v942, %v942
        %v1007 = vpack.c.b16 %v943, %v943
        %v1008 = vpack.c.b16 %v944, %v944
        %v1009 = vpack.c.b16 %v945, %v945
        %v1010 = vpack.c.b16 %v946, %v946
        %v1011 = vpack.c.b16 %v947, %v947
        %v1012 = vpack.c.b16 %v948, %v948
        %v1013 = vpack.c.b16 %v949, %v949
        %v1014 = vpack.c.b16 %v950, %v950
        %v1015 = vpack.c.b16 %v951, %v951
        %v1016 = vpack.c.b16 %v952, %v952
        %v1017 = vpack.c.b16 %v953, %v953
        %v1018 = vpack.c.b16 %v954, %v954
        %v1019 = vpack.c.b16 %v955, %v955
        %v1020 = vpack.c.b16 %v956, %v956
        %v1021 = vpack.c.b16 %v957, %v957
        %v1022 = vpack.c.b16 %v958, %v958
        %vm1087 = vcmask 519168
        %1088 = vst.msk [vmem:[%s196] sm:$0xf] %vm1087, %v959
        %1089 = vst.msk [vmem:[%s196 + $0x4] sm:$0xf] %vm1087, %v960
        %1090 = vst.msk [vmem:[%s196 + $0x8] sm:$0xf] %vm1087, %v961
        %1091 = vst.msk [vmem:[%s196 + $0xc] sm:$0xf] %vm1087, %v962
        %1092 = vst.msk [vmem:[%s196 + $0x10] sm:$0xf] %vm1087, %v963
        %1093 = vst.msk [vmem:[%s196 + $0x14] sm:$0xf] %vm1087, %v964
        %1094 = vst.msk [vmem:[%s196 + $0x18] sm:$0xf] %vm1087, %v965
        %1095 = vst.msk [vmem:[%s196 + $0x1c] sm:$0xf] %vm1087, %v966
        %1096 = vst.msk [vmem:[%s196 + $0x20] sm:$0xf] %vm1087, %v967
        %1097 = vst.msk [vmem:[%s196 + $0x24] sm:$0xf] %vm1087, %v968
        %1098 = vst.msk [vmem:[%s196 + $0x28] sm:$0xf] %vm1087, %v969
        %1099 = vst.msk [vmem:[%s196 + $0x2c] sm:$0xf] %vm1087, %v970
        %1100 = vst.msk [vmem:[%s196 + $0x30] sm:$0xf] %vm1087, %v971
        %1101 = vst.msk [vmem:[%s196 + $0x34] sm:$0xf] %vm1087, %v972
        %1102 = vst.msk [vmem:[%s196 + $0x38] sm:$0xf] %vm1087, %v973
        %1103 = vst.msk [vmem:[%s196 + $0x3c] sm:$0xf] %vm1087, %v974
        %1104 = vst.msk [vmem:[%s196 + $0x40] sm:$0xf] %vm1087, %v975
        %1105 = vst.msk [vmem:[%s196 + $0x44] sm:$0xf] %vm1087, %v976
        %1106 = vst.msk [vmem:[%s196 + $0x48] sm:$0xf] %vm1087, %v977
        %1107 = vst.msk [vmem:[%s196 + $0x4c] sm:$0xf] %vm1087, %v978
        %1108 = vst.msk [vmem:[%s196 + $0x50] sm:$0xf] %vm1087, %v979
        %1109 = vst.msk [vmem:[%s196 + $0x54] sm:$0xf] %vm1087, %v980
        %1110 = vst.msk [vmem:[%s196 + $0x58] sm:$0xf] %vm1087, %v981
        %1111 = vst.msk [vmem:[%s196 + $0x5c] sm:$0xf] %vm1087, %v982
        %1112 = vst.msk [vmem:[%s196 + $0x60] sm:$0xf] %vm1087, %v983
        %1113 = vst.msk [vmem:[%s196 + $0x64] sm:$0xf] %vm1087, %v984
        %1114 = vst.msk [vmem:[%s196 + $0x68] sm:$0xf] %vm1087, %v985
        %1115 = vst.msk [vmem:[%s196 + $0x6c] sm:$0xf] %vm1087, %v986
        %1116 = vst.msk [vmem:[%s196 + $0x70] sm:$0xf] %vm1087, %v987
        %1117 = vst.msk [vmem:[%s196 + $0x74] sm:$0xf] %vm1087, %v988
        %1118 = vst.msk [vmem:[%s196 + $0x78] sm:$0xf] %vm1087, %v989
        %1119 = vst.msk [vmem:[%s196 + $0x7c] sm:$0xf] %vm1087, %v990
        %1120 = vst.msk [vmem:[%s196 + $0x80] sm:$0xf] %vm1087, %v991
        %1121 = vst.msk [vmem:[%s196 + $0x84] sm:$0xf] %vm1087, %v992
        %1122 = vst.msk [vmem:[%s196 + $0x88] sm:$0xf] %vm1087, %v993
        %1123 = vst.msk [vmem:[%s196 + $0x8c] sm:$0xf] %vm1087, %v994
        %1124 = vst.msk [vmem:[%s196 + $0x90] sm:$0xf] %vm1087, %v995
        %1125 = vst.msk [vmem:[%s196 + $0x94] sm:$0xf] %vm1087, %v996
        %1126 = vst.msk [vmem:[%s196 + $0x98] sm:$0xf] %vm1087, %v997
        %1127 = vst.msk [vmem:[%s196 + $0x9c] sm:$0xf] %vm1087, %v998
        %1128 = vst.msk [vmem:[%s196 + $0xa0] sm:$0xf] %vm1087, %v999
        %1129 = vst.msk [vmem:[%s196 + $0xa4] sm:$0xf] %vm1087, %v1000
        %1130 = vst.msk [vmem:[%s196 + $0xa8] sm:$0xf] %vm1087, %v1001
        %1131 = vst.msk [vmem:[%s196 + $0xac] sm:$0xf] %vm1087, %v1002
        %1132 = vst.msk [vmem:[%s196 + $0xb0] sm:$0xf] %vm1087, %v1003
        %1133 = vst.msk [vmem:[%s196 + $0xb4] sm:$0xf] %vm1087, %v1004
        %1134 = vst.msk [vmem:[%s196 + $0xb8] sm:$0xf] %vm1087, %v1005
        %1135 = vst.msk [vmem:[%s196 + $0xbc] sm:$0xf] %vm1087, %v1006
        %1136 = vst.msk [vmem:[%s196 + $0xc0] sm:$0xf] %vm1087, %v1007
        %1137 = vst.msk [vmem:[%s196 + $0xc4] sm:$0xf] %vm1087, %v1008
        %1138 = vst.msk [vmem:[%s196 + $0xc8] sm:$0xf] %vm1087, %v1009
        %1139 = vst.msk [vmem:[%s196 + $0xcc] sm:$0xf] %vm1087, %v1010
        %1140 = vst.msk [vmem:[%s196 + $0xd0] sm:$0xf] %vm1087, %v1011
        %1141 = vst.msk [vmem:[%s196 + $0xd4] sm:$0xf] %vm1087, %v1012
        %1142 = vst.msk [vmem:[%s196 + $0xd8] sm:$0xf] %vm1087, %v1013
        %1143 = vst.msk [vmem:[%s196 + $0xdc] sm:$0xf] %vm1087, %v1014
        %1144 = vst.msk [vmem:[%s196 + $0xe0] sm:$0xf] %vm1087, %v1015
        %1145 = vst.msk [vmem:[%s196 + $0xe4] sm:$0xf] %vm1087, %v1016
        %1146 = vst.msk [vmem:[%s196 + $0xe8] sm:$0xf] %vm1087, %v1017
        %1147 = vst.msk [vmem:[%s196 + $0xec] sm:$0xf] %vm1087, %v1018
        %1148 = vst.msk [vmem:[%s196 + $0xf0] sm:$0xf] %vm1087, %v1019
        %1149 = vst.msk [vmem:[%s196 + $0xf4] sm:$0xf] %vm1087, %v1020
        %1150 = vst.msk [vmem:[%s196 + $0xf8] sm:$0xf] %vm1087, %v1021
        %1151 = vst.msk [vmem:[%s196 + $0xfc] sm:$0xf] %vm1087, %v1022
        %p1152 = scmp.eq.s32.totalorder %s18, 0
        // Predicated region
        $region29: #{tpu_custom_call.1} parent=27 // pred_check
          %p1153 = pneg %p1152
        $region30: #{tpu_custom_call.1} parent=27 // pred_check_branch
          %1155 = sbr.rel (%p1153) target = $region32
        $region31: #{tpu_custom_call.1} parent=27 // pred_region
          %vm1156 = vcmask 516096
          %1157 = vst.msk [vmem:[#allocation2] sm:$0x1] %vm1156, 0.0
          %1158 = vst.msk [vmem:[#allocation4] sm:$0x1] %vm1156, 0.0
        $region32: #{tpu_custom_call.1} parent=27 // pred_fallthru
          _
        %v1159 = vld [vmem:[#allocation2] sm:$0x1]
        %vm1160 = vcmask 523264
        %v1161 = vsel %vm1160, %v577, 0.0
        %v1162 = vsel %vm1160, %v580, 0.0
        %v1163 = vadd.f32 %v1161, %v1162
        %v1164 = vsel %vm1160, %v585, 0.0
        %v1165 = vadd.f32 %v1163, %v1164
        %v1166 = vsel %vm1160, %v588, 0.0
        %v1167 = vadd.f32 %v1165, %v1166
        %v1168 = vsel %vm1160, %v593, 0.0
        %v1169 = vadd.f32 %v1167, %v1168
        %v1170 = vsel %vm1160, %v596, 0.0
        %v1171 = vadd.f32 %v1169, %v1170
        %v1172 = vsel %vm1160, %v601, 0.0
        %v1173 = vadd.f32 %v1171, %v1172
        %v1174 = vsel %vm1160, %v604, 0.0
        %v1175 = vadd.f32 %v1173, %v1174
        %v1176 = vsel %vm1160, %v609, 0.0
        %v1177 = vadd.f32 %v1175, %v1176
        %v1178 = vsel %vm1160, %v612, 0.0
        %v1179 = vadd.f32 %v1177, %v1178
        %v1180 = vsel %vm1160, %v617, 0.0
        %v1181 = vadd.f32 %v1179, %v1180
        %v1182 = vsel %vm1160, %v620, 0.0
        %v1183 = vadd.f32 %v1181, %v1182
        %v1184 = vsel %vm1160, %v625, 0.0
        %v1185 = vadd.f32 %v1183, %v1184
        %v1186 = vsel %vm1160, %v628, 0.0
        %v1187 = vadd.f32 %v1185, %v1186
        %v1188 = vsel %vm1160, %v633, 0.0
        %v1189 = vadd.f32 %v1187, %v1188
        %v1190 = vsel %vm1160, %v636, 0.0
        %v1191 = vadd.f32 %v1189, %v1190
        %v1192 = vsel %vm1160, %v641, 0.0
        %v1193 = vadd.f32 %v1191, %v1192
        %v1194 = vsel %vm1160, %v644, 0.0
        %v1195 = vadd.f32 %v1193, %v1194
        %v1196 = vsel %vm1160, %v649, 0.0
        %v1197 = vadd.f32 %v1195, %v1196
        %v1198 = vsel %vm1160, %v652, 0.0
        %v1199 = vadd.f32 %v1197, %v1198
        %v1200 = vsel %vm1160, %v657, 0.0
        %v1201 = vadd.f32 %v1199, %v1200
        %v1202 = vsel %vm1160, %v660, 0.0
        %v1203 = vadd.f32 %v1201, %v1202
        %v1204 = vsel %vm1160, %v665, 0.0
        %v1205 = vadd.f32 %v1203, %v1204
        %v1206 = vsel %vm1160, %v668, 0.0
        %v1207 = vadd.f32 %v1205, %v1206
        %v1208 = vsel %vm1160, %v673, 0.0
        %v1209 = vadd.f32 %v1207, %v1208
        %v1210 = vsel %vm1160, %v676, 0.0
        %v1211 = vadd.f32 %v1209, %v1210
        %v1212 = vsel %vm1160, %v681, 0.0
        %v1213 = vadd.f32 %v1211, %v1212
        %v1214 = vsel %vm1160, %v684, 0.0
        %v1215 = vadd.f32 %v1213, %v1214
        %v1216 = vsel %vm1160, %v689, 0.0
        %v1217 = vadd.f32 %v1215, %v1216
        %v1218 = vsel %vm1160, %v692, 0.0
        %v1219 = vadd.f32 %v1217, %v1218
        %v1220 = vsel %vm1160, %v697, 0.0
        %v1221 = vadd.f32 %v1219, %v1220
        %v1222 = vsel %vm1160, %v700, 0.0
        %v1223 = vadd.f32 %v1221, %v1222
        %v1224 = vsel %vm1160, %v705, 0.0
        %v1225 = vadd.f32 %v1223, %v1224
        %v1226 = vsel %vm1160, %v708, 0.0
        %v1227 = vadd.f32 %v1225, %v1226
        %v1228 = vsel %vm1160, %v713, 0.0
        %v1229 = vadd.f32 %v1227, %v1228
        %v1230 = vsel %vm1160, %v716, 0.0
        %v1231 = vadd.f32 %v1229, %v1230
        %v1232 = vsel %vm1160, %v721, 0.0
        %v1233 = vadd.f32 %v1231, %v1232
        %v1234 = vsel %vm1160, %v724, 0.0
        %v1235 = vadd.f32 %v1233, %v1234
        %v1236 = vsel %vm1160, %v729, 0.0
        %v1237 = vadd.f32 %v1235, %v1236
        %v1238 = vsel %vm1160, %v732, 0.0
        %v1239 = vadd.f32 %v1237, %v1238
        %v1240 = vsel %vm1160, %v737, 0.0
        %v1241 = vadd.f32 %v1239, %v1240
        %v1242 = vsel %vm1160, %v740, 0.0
        %v1243 = vadd.f32 %v1241, %v1242
        %v1244 = vsel %vm1160, %v745, 0.0
        %v1245 = vadd.f32 %v1243, %v1244
        %v1246 = vsel %vm1160, %v748, 0.0
        %v1247 = vadd.f32 %v1245, %v1246
        %v1248 = vsel %vm1160, %v753, 0.0
        %v1249 = vadd.f32 %v1247, %v1248
        %v1250 = vsel %vm1160, %v756, 0.0
        %v1251 = vadd.f32 %v1249, %v1250
        %v1252 = vsel %vm1160, %v761, 0.0
        %v1253 = vadd.f32 %v1251, %v1252
        %v1254 = vsel %vm1160, %v764, 0.0
        %v1255 = vadd.f32 %v1253, %v1254
        %v1256 = vsel %vm1160, %v769, 0.0
        %v1257 = vadd.f32 %v1255, %v1256
        %v1258 = vsel %vm1160, %v772, 0.0
        %v1259 = vadd.f32 %v1257, %v1258
        %v1260 = vsel %vm1160, %v777, 0.0
        %v1261 = vadd.f32 %v1259, %v1260
        %v1262 = vsel %vm1160, %v780, 0.0
        %v1263 = vadd.f32 %v1261, %v1262
        %v1264 = vsel %vm1160, %v785, 0.0
        %v1265 = vadd.f32 %v1263, %v1264
        %v1266 = vsel %vm1160, %v788, 0.0
        %v1267 = vadd.f32 %v1265, %v1266
        %v1268 = vsel %vm1160, %v793, 0.0
        %v1269 = vadd.f32 %v1267, %v1268
        %v1270 = vsel %vm1160, %v796, 0.0
        %v1271 = vadd.f32 %v1269, %v1270
        %v1272 = vsel %vm1160, %v801, 0.0
        %v1273 = vadd.f32 %v1271, %v1272
        %v1274 = vsel %vm1160, %v804, 0.0
        %v1275 = vadd.f32 %v1273, %v1274
        %v1276 = vsel %vm1160, %v809, 0.0
        %v1277 = vadd.f32 %v1275, %v1276
        %v1278 = vsel %vm1160, %v812, 0.0
        %v1279 = vadd.f32 %v1277, %v1278
        %v1280 = vsel %vm1160, %v817, 0.0
        %v1281 = vadd.f32 %v1279, %v1280
        %v1282 = vsel %vm1160, %v820, 0.0
        %v1283 = vadd.f32 %v1281, %v1282
        %v1284 = vsel %vm1160, %v825, 0.0
        %v1285 = vadd.f32 %v1283, %v1284
        %v1286 = vsel %vm1160, %v828, 0.0
        %v1287 = vadd.f32 %v1285, %v1286
        %v1288 = vrot.slane %v1287, 4
        %v1289 = vadd.f32 %v1287, %v1288
        %v1290 = vrot.slane %v1289, 2
        %v1291 = vadd.f32 %v1289, %v1290
        %v1292 = vrot.slane %v1291, 1
        %v1293 = vadd.f32 %v1291, %v1292
        %v1294 = vadd.f32 %v1159, %v1293
        %vm1295 = vcmask 516096
        %1296 = vst.msk [vmem:[#allocation2] sm:$0x1] %vm1295, %v1294
        %v1297 = vld [vmem:[#allocation4] sm:$0x1]
        %v1298 = vmul.f32 %v577, %v577
        %v1299 = vmul.f32 %v580, %v580
        %v1300 = vmul.f32 %v585, %v585
        %v1301 = vmul.f32 %v588, %v588
        %v1302 = vmul.f32 %v593, %v593
        %v1303 = vmul.f32 %v596, %v596
        %v1304 = vmul.f32 %v601, %v601
        %v1305 = vmul.f32 %v604, %v604
        %v1306 = vmul.f32 %v609, %v609
        %v1307 = vmul.f32 %v612, %v612
        %v1308 = vmul.f32 %v617, %v617
        %v1309 = vmul.f32 %v620, %v620
        %v1310 = vmul.f32 %v625, %v625
        %v1311 = vmul.f32 %v628, %v628
        %v1312 = vmul.f32 %v633, %v633
        %v1313 = vmul.f32 %v636, %v636
        %v1314 = vmul.f32 %v641, %v641
        %v1315 = vmul.f32 %v644, %v644
        %v1316 = vmul.f32 %v649, %v649
        %v1317 = vmul.f32 %v652, %v652
        %v1318 = vmul.f32 %v657, %v657
        %v1319 = vmul.f32 %v660, %v660
        %v1320 = vmul.f32 %v665, %v665
        %v1321 = vmul.f32 %v668, %v668
        %v1322 = vmul.f32 %v673, %v673
        %v1323 = vmul.f32 %v676, %v676
        %v1324 = vmul.f32 %v681, %v681
        %v1325 = vmul.f32 %v684, %v684
        %v1326 = vmul.f32 %v689, %v689
        %v1327 = vmul.f32 %v692, %v692
        %v1328 = vmul.f32 %v697, %v697
        %v1329 = vmul.f32 %v700, %v700
        %v1330 = vmul.f32 %v705, %v705
        %v1331 = vmul.f32 %v708, %v708
        %v1332 = vmul.f32 %v713, %v713
        %v1333 = vmul.f32 %v716, %v716
        %v1334 = vmul.f32 %v721, %v721
        %v1335 = vmul.f32 %v724, %v724
        %v1336 = vmul.f32 %v729, %v729
        %v1337 = vmul.f32 %v732, %v732
        %v1338 = vmul.f32 %v737, %v737
        %v1339 = vmul.f32 %v740, %v740
        %v1340 = vmul.f32 %v745, %v745
        %v1341 = vmul.f32 %v748, %v748
        %v1342 = vmul.f32 %v753, %v753
        %v1343 = vmul.f32 %v756, %v756
        %v1344 = vmul.f32 %v761, %v761
        %v1345 = vmul.f32 %v764, %v764
        %v1346 = vmul.f32 %v769, %v769
        %v1347 = vmul.f32 %v772, %v772
        %v1348 = vmul.f32 %v777, %v777
        %v1349 = vmul.f32 %v780, %v780
        %v1350 = vmul.f32 %v785, %v785
        %v1351 = vmul.f32 %v788, %v788
        %v1352 = vmul.f32 %v793, %v793
        %v1353 = vmul.f32 %v796, %v796
        %v1354 = vmul.f32 %v801, %v801
        %v1355 = vmul.f32 %v804, %v804
        %v1356 = vmul.f32 %v809, %v809
        %v1357 = vmul.f32 %v812, %v812
        %v1358 = vmul.f32 %v817, %v817
        %v1359 = vmul.f32 %v820, %v820
        %v1360 = vmul.f32 %v825, %v825
        %v1361 = vmul.f32 %v828, %v828
        %v1362 = vsel %vm1160, %v1298, 0.0
        %v1363 = vsel %vm1160, %v1299, 0.0
        %v1364 = vadd.f32 %v1362, %v1363
        %v1365 = vsel %vm1160, %v1300, 0.0
        %v1366 = vadd.f32 %v1364, %v1365
        %v1367 = vsel %vm1160, %v1301, 0.0
        %v1368 = vadd.f32 %v1366, %v1367
        %v1369 = vsel %vm1160, %v1302, 0.0
        %v1370 = vadd.f32 %v1368, %v1369
        %v1371 = vsel %vm1160, %v1303, 0.0
        %v1372 = vadd.f32 %v1370, %v1371
        %v1373 = vsel %vm1160, %v1304, 0.0
        %v1374 = vadd.f32 %v1372, %v1373
        %v1375 = vsel %vm1160, %v1305, 0.0
        %v1376 = vadd.f32 %v1374, %v1375
        %v1377 = vsel %vm1160, %v1306, 0.0
        %v1378 = vadd.f32 %v1376, %v1377
        %v1379 = vsel %vm1160, %v1307, 0.0
        %v1380 = vadd.f32 %v1378, %v1379
        %v1381 = vsel %vm1160, %v1308, 0.0
        %v1382 = vadd.f32 %v1380, %v1381
        %v1383 = vsel %vm1160, %v1309, 0.0
        %v1384 = vadd.f32 %v1382, %v1383
        %v1385 = vsel %vm1160, %v1310, 0.0
        %v1386 = vadd.f32 %v1384, %v1385
        %v1387 = vsel %vm1160, %v1311, 0.0
        %v1388 = vadd.f32 %v1386, %v1387
        %v1389 = vsel %vm1160, %v1312, 0.0
        %v1390 = vadd.f32 %v1388, %v1389
        %v1391 = vsel %vm1160, %v1313, 0.0
        %v1392 = vadd.f32 %v1390, %v1391
        %v1393 = vsel %vm1160, %v1314, 0.0
        %v1394 = vadd.f32 %v1392, %v1393
        %v1395 = vsel %vm1160, %v1315, 0.0
        %v1396 = vadd.f32 %v1394, %v1395
        %v1397 = vsel %vm1160, %v1316, 0.0
        %v1398 = vadd.f32 %v1396, %v1397
        %v1399 = vsel %vm1160, %v1317, 0.0
        %v1400 = vadd.f32 %v1398, %v1399
        %v1401 = vsel %vm1160, %v1318, 0.0
        %v1402 = vadd.f32 %v1400, %v1401
        %v1403 = vsel %vm1160, %v1319, 0.0
        %v1404 = vadd.f32 %v1402, %v1403
        %v1405 = vsel %vm1160, %v1320, 0.0
        %v1406 = vadd.f32 %v1404, %v1405
        %v1407 = vsel %vm1160, %v1321, 0.0
        %v1408 = vadd.f32 %v1406, %v1407
        %v1409 = vsel %vm1160, %v1322, 0.0
        %v1410 = vadd.f32 %v1408, %v1409
        %v1411 = vsel %vm1160, %v1323, 0.0
        %v1412 = vadd.f32 %v1410, %v1411
        %v1413 = vsel %vm1160, %v1324, 0.0
        %v1414 = vadd.f32 %v1412, %v1413
        %v1415 = vsel %vm1160, %v1325, 0.0
        %v1416 = vadd.f32 %v1414, %v1415
        %v1417 = vsel %vm1160, %v1326, 0.0
        %v1418 = vadd.f32 %v1416, %v1417
        %v1419 = vsel %vm1160, %v1327, 0.0
        %v1420 = vadd.f32 %v1418, %v1419
        %v1421 = vsel %vm1160, %v1328, 0.0
        %v1422 = vadd.f32 %v1420, %v1421
        %v1423 = vsel %vm1160, %v1329, 0.0
        %v1424 = vadd.f32 %v1422, %v1423
        %v1425 = vsel %vm1160, %v1330, 0.0
        %v1426 = vadd.f32 %v1424, %v1425
        %v1427 = vsel %vm1160, %v1331, 0.0
        %v1428 = vadd.f32 %v1426, %v1427
        %v1429 = vsel %vm1160, %v1332, 0.0
        %v1430 = vadd.f32 %v1428, %v1429
        %v1431 = vsel %vm1160, %v1333, 0.0
        %v1432 = vadd.f32 %v1430, %v1431
        %v1433 = vsel %vm1160, %v1334, 0.0
        %v1434 = vadd.f32 %v1432, %v1433
        %v1435 = vsel %vm1160, %v1335, 0.0
        %v1436 = vadd.f32 %v1434, %v1435
        %v1437 = vsel %vm1160, %v1336, 0.0
        %v1438 = vadd.f32 %v1436, %v1437
        %v1439 = vsel %vm1160, %v1337, 0.0
        %v1440 = vadd.f32 %v1438, %v1439
        %v1441 = vsel %vm1160, %v1338, 0.0
        %v1442 = vadd.f32 %v1440, %v1441
        %v1443 = vsel %vm1160, %v1339, 0.0
        %v1444 = vadd.f32 %v1442, %v1443
        %v1445 = vsel %vm1160, %v1340, 0.0
        %v1446 = vadd.f32 %v1444, %v1445
        %v1447 = vsel %vm1160, %v1341, 0.0
        %v1448 = vadd.f32 %v1446, %v1447
        %v1449 = vsel %vm1160, %v1342, 0.0
        %v1450 = vadd.f32 %v1448, %v1449
        %v1451 = vsel %vm1160, %v1343, 0.0
        %v1452 = vadd.f32 %v1450, %v1451
        %v1453 = vsel %vm1160, %v1344, 0.0
        %v1454 = vadd.f32 %v1452, %v1453
        %v1455 = vsel %vm1160, %v1345, 0.0
        %v1456 = vadd.f32 %v1454, %v1455
        %v1457 = vsel %vm1160, %v1346, 0.0
        %v1458 = vadd.f32 %v1456, %v1457
        %v1459 = vsel %vm1160, %v1347, 0.0
        %v1460 = vadd.f32 %v1458, %v1459
        %v1461 = vsel %vm1160, %v1348, 0.0
        %v1462 = vadd.f32 %v1460, %v1461
        %v1463 = vsel %vm1160, %v1349, 0.0
        %v1464 = vadd.f32 %v1462, %v1463
        %v1465 = vsel %vm1160, %v1350, 0.0
        %v1466 = vadd.f32 %v1464, %v1465
        %v1467 = vsel %vm1160, %v1351, 0.0
        %v1468 = vadd.f32 %v1466, %v1467
        %v1469 = vsel %vm1160, %v1352, 0.0
        %v1470 = vadd.f32 %v1468, %v1469
        %v1471 = vsel %vm1160, %v1353, 0.0
        %v1472 = vadd.f32 %v1470, %v1471
        %v1473 = vsel %vm1160, %v1354, 0.0
        %v1474 = vadd.f32 %v1472, %v1473
        %v1475 = vsel %vm1160, %v1355, 0.0
        %v1476 = vadd.f32 %v1474, %v1475
        %v1477 = vsel %vm1160, %v1356, 0.0
        %v1478 = vadd.f32 %v1476, %v1477
        %v1479 = vsel %vm1160, %v1357, 0.0
        %v1480 = vadd.f32 %v1478, %v1479
        %v1481 = vsel %vm1160, %v1358, 0.0
        %v1482 = vadd.f32 %v1480, %v1481
        %v1483 = vsel %vm1160, %v1359, 0.0
        %v1484 = vadd.f32 %v1482, %v1483
        %v1485 = vsel %vm1160, %v1360, 0.0
        %v1486 = vadd.f32 %v1484, %v1485
        %v1487 = vsel %vm1160, %v1361, 0.0
        %v1488 = vadd.f32 %v1486, %v1487
        %v1489 = vrot.slane %v1488, 4
        %v1490 = vadd.f32 %v1488, %v1489
        %v1491 = vrot.slane %v1490, 2
        %v1492 = vadd.f32 %v1490, %v1491
        %v1493 = vrot.slane %v1492, 1
        %v1494 = vadd.f32 %v1492, %v1493
        %v1495 = vadd.f32 %v1297, %v1494
        %1496 = vst.msk [vmem:[#allocation4] sm:$0x1] %vm1295, %v1495
        %s1497 = smul.u32 64, %s18
        %p1498 = scmp.lt.s32.totalorder %s1497, 255
        %s1499 = scalar_select %p1498, %s1497, 255
        %s1500 = smul.addr %s1499, 4
        %s1501 = scalar_lea.vmem %s2, %s1500
        // Predicated region
        $region33: #{tpu_custom_call.1} parent=27 // pred_check
          %p1502 = pneg %p83
        $region34: #{tpu_custom_call.1} parent=27 // pred_check_branch
          %1504 = sbr.rel (%p1502) target = $region36
        $region35: #{tpu_custom_call.1} parent=27 // pred_region
          %s1505 = smul.u32 64, %s18
        $region36: #{tpu_custom_call.1} parent=27 // pred_fallthru
          _
        // Predicated region
        $region37: #{tpu_custom_call.1} parent=27 // pred_check
          %p1506 = pneg %p104
        $region38: #{tpu_custom_call.1} parent=27 // pred_check_branch
          %1508 = sbr.rel (%p1506) target = $region40
        $region39: #{tpu_custom_call.1} parent=27 // pred_region
          %s1510 = ssub.s32 16, 16
          %1511 = vsyncadd [#allocation3], %s1510
          %s1513 = sshll.u32 [#allocation2], 4
          %s1514 = int_to_ptr.vmem [resolvable:$true] %s1513
          %1516 = dma.vmem_to_hbm [thread:$0]  %s1514, 16, %s3, [#allocation3]
        $region40: #{tpu_custom_call.1} parent=27 // pred_fallthru
          _
        // Predicated region
        $region41: #{tpu_custom_call.1} parent=27 // pred_check
          %p1517 = pneg %p125
        $region42: #{tpu_custom_call.1} parent=27 // pred_check_branch
          %1519 = sbr.rel (%p1517) target = $region44
        $region43: #{tpu_custom_call.1} parent=27 // pred_region
          %s1521 = ssub.s32 16, 16
          %1522 = vsyncadd [#allocation5], %s1521
          %s1524 = sshll.u32 [#allocation4], 4
          %s1525 = int_to_ptr.vmem [resolvable:$true] %s1524
          %1527 = dma.vmem_to_hbm [thread:$0]  %s1525, 16, %s4, [#allocation5]
        $region44: #{tpu_custom_call.1} parent=27 // pred_fallthru
          _
        // Predicated region
        $region45: #{tpu_custom_call.1} parent=27 // pred_check
          %p1528 = pneg %p104
        $region46: #{tpu_custom_call.1} parent=27 // pred_check_branch
          %1530 = sbr.rel (%p1528) target = $region48
        $region47: #{tpu_custom_call.1} parent=27 // pred_region
          %1531 = dma.done [#allocation3], 16
        $region48: #{tpu_custom_call.1} parent=27 // pred_fallthru
          _
        // Predicated region
        $region49: #{tpu_custom_call.1} parent=27 // pred_check
          %p1532 = pneg %p125
        $region50: #{tpu_custom_call.1} parent=27 // pred_check_branch
          %1534 = sbr.rel (%p1532) target = $region52
        $region51: #{tpu_custom_call.1} parent=27 // pred_region
          %1535 = dma.done [#allocation5], 16
        $region52: #{tpu_custom_call.1} parent=27 // pred_fallthru
          _
      $region28: #{tpu_custom_call.1} parent=5 // pred_fallthru
        _
      %p1536 = scmp.le.s32.totalorder 2, %s13
      // Predicated region
      $region53: #{tpu_custom_call.1} parent=5 // pred_check
        %p1537 = pneg %p1536
      $region54: #{tpu_custom_call.1} parent=5 // pred_check_branch
        %1539 = sbr.rel (%p1537) target = $region56
      $region55: #{tpu_custom_call.1} parent=5 // pred_region
        %s1540 = ssub.s32 %s13, 2
        // Predicated region
        $region57: #{tpu_custom_call.1} parent=55 // pred_check
          %p1541 = pneg %p89
        $region58: #{tpu_custom_call.1} parent=55 // pred_check_branch
          %1543 = sbr.rel (%p1541) target = $region60
        $region59: #{tpu_custom_call.1} parent=55 // pred_region
          %s1544 = smul.u32 64, %s19
          %p1545 = scmp.lt.s32.totalorder %s1544, 255
          %s1546 = scalar_select %p1545, %s1544, 255
          %s1547 = smul.addr %s1546, 4
          %s1548 = scalar_lea.vmem %s2, %s1547
        $region60: #{tpu_custom_call.1} parent=55 // pred_fallthru
          _
      $region56: #{tpu_custom_call.1} parent=5 // pred_fallthru
        _
    $region6: #{tpu_custom_call.1} parent=1 // loop_footer
      %s17 = sadd.s32 1, %s13
    $region7: #{tpu_custom_call.1} parent=1 // loop_footer_branch
      %12 = sbr.rel target = $region3
    $region8: #{tpu_custom_call.1} parent=1 // loop_exit
      _
    %1549 = vsyncpa [#allocation3], 1
    %s1550 = scalar_lea.sflag [#allocation3], 1
    %1551 = vsyncpa %s1550, 1
    %1552 = vsyncpa [#allocation5], 1

</llo_original>
